<compile_context>
chip_gen: v6e
topology: v6e:2x2x1
jax: 0.10.0
libtpu: 0.0.40
codegen_flags: <defaults>
</compile_context>

<pallas_src>
import functools

import jax
import jax.numpy as jnp
from jax import lax
from jax.experimental import pallas as pl
from jax.experimental.pallas import tpu as pltpu


# ----------------------------------------------------------------------------
# Kernel
# ----------------------------------------------------------------------------
def _mscnn_kernel(xp_ref, rf_ref, bcat_ref, r4_ref, b4_ref, out_ref,
                  *, B, H, W, C):
    """Fused MultiScaleCNN forward.

    xp_ref  : (B, H+4, (W+4)*C)   zero-padded input, (w, c) flattened into lanes
    rf_ref  : (5, (W+4)*C, W*3C)  banded fused branch weights (one per row tap)
    bcat_ref: (1, W*3C)           concat(b1, b2, b3) tiled across W
    r4_ref  : (3, W*3C, W*C)      banded final-conv weights (one per row tap)
    b4_ref  : (1, W*C)            b4 tiled across W
    out_ref : (B*H, W*C)          lane-dense output slab
    """
    BH = B * H
    Kin = (W + 4) * C
    L3 = W * 3 * C
    Lo = W * C

    # --- stage 1: 1x1 + 3x3 + 5x5 branches as 5 banded matmuls (concat free) ---
    acc1 = jnp.zeros((BH, L3), jnp.float32)
    for dy in range(5):
        rows = xp_ref[:, dy:dy + H, :].reshape(BH, Kin)      # slice from ref per tap
        acc1 = acc1 + jnp.dot(rows, rf_ref[dy],
                              preferred_element_type=jnp.float32)
    ycat = jnp.maximum(acc1 + bcat_ref[...], 0.0)            # (B*H, W*3C)

    # --- stage 2: final 3x3 conv.  W-boundary zero padding is baked into r4;
    #     H-boundary zero padding comes from the explicit zero rows below. ---
    zrow = jnp.zeros((B, 1, L3), jnp.float32)
    ycat_pad = jnp.concatenate([zrow, ycat.reshape(B, H, L3), zrow], axis=1)
    acc2 = jnp.zeros((BH, Lo), jnp.float32)
    for ky in range(3):
        rows = ycat_pad[:, ky:ky + H, :].reshape(BH, L3)
        acc2 = acc2 + jnp.dot(rows, r4_ref[ky],
                              preferred_element_type=jnp.float32)

    out_ref[...] = jnp.maximum(acc2 + b4_ref[...], 0.0).astype(out_ref.dtype)


# ----------------------------------------------------------------------------
# Weight preparation (one-time layout plumbing, done in the wrapper)
# ----------------------------------------------------------------------------
def _band_from_row(wrow, w_in, w_out, shift):
    """wrow: (K, Cin, Cout) — the horizontal taps of one kernel row.

    Returns R of shape (w_in*Cin, w_out*Cout) with
        R[(wi, c), (wo, o)] = wrow[wi - wo + shift, c, o]  if 0 <= wi-wo+shift < K
                              0                            otherwise
    so `x2d @ R` folds the horizontal taps AND the W-boundary zero padding into
    a single matmul.  Built with exact 0/1 broadcasts (no dot precision issues).
    """
    K, cin, cout = wrow.shape
    blocks = jnp.zeros((w_in, cin, w_out, cout), wrow.dtype)
    for kx in range(K):
        sel = jnp.eye(w_in, w_out, k=-(kx - shift), dtype=wrow.dtype)   # (w_in, w_out)
        blocks = blocks + sel[:, None, :, None] * wrow[kx][None, :, None, :]
    return blocks.reshape(w_in * cin, w_out * cout)


def _prepare_weights(params, C, W):
    w1, w2, w3, w4 = params['w1'], params['w2'], params['w3'], params['w4']
    b1, b2, b3, b4 = params['b1'], params['b2'], params['b3'], params['b4']

    # Fuse the three branch weights into one 5x5 footprint -> concat for free.
    # Output channel order matches torch.cat((x1, x2, x3), dim=1).
    wf = jnp.zeros((5, 5, C, 3 * C), jnp.float32)
    wf = wf.at[2, 2, :, 0:C].set(w1[0, 0])          # 1x1 at the center tap
    wf = wf.at[1:4, 1:4, :, C:2 * C].set(w2)        # 3x3 in the center 3x3
    wf = wf.at[:, :, :, 2 * C:3 * C].set(w3)        # 5x5 everywhere

    rf = jnp.stack([_band_from_row(wf[dy], W + 4, W, 0) for dy in range(5)])
    r4 = jnp.stack([_band_from_row(w4[ky], W, W, 1) for ky in range(3)])

    bcat = jnp.tile(jnp.concatenate([b1[0], b2[0], b3[0]]), W).reshape(1, W * 3 * C)
    b4r = jnp.tile(b4[0], W).reshape(1, W * C)
    return rf, r4, bcat, b4r


# ----------------------------------------------------------------------------
# Wrapper
# ----------------------------------------------------------------------------
@jax.jit
def multi_scale_cnn(x_nchw, params):
    """x_nchw: (B, C, H, W).  params: w1..w4 as (KH,KW,Cin,Cout), b1..b4 as (1,C)."""
    B, C, H, W = x_nchw.shape
    x = jnp.transpose(x_nchw, (0, 2, 3, 1))                     # NCHW -> NHWC
    xp = jnp.pad(x, ((0, 0), (2, 2), (2, 2), (0, 0)))           # shared 5x5 halo
    xp2 = xp.reshape(B, H + 4, (W + 4) * C)                     # (w, c) -> lanes

    rf, r4, bcat, b4r = _prepare_weights(params, C, W)

    kernel = functools.partial(_mscnn_kernel, B=B, H=H, W=W, C=C)

    out2d = pl.pallas_call(
        kernel,
        out_shape=jax.ShapeDtypeStruct((B * H, W * C), x.dtype),
        grid_spec=pltpu.PrefetchScalarGridSpec(
            num_scalar_prefetch=0,
            grid=(1,),
            in_specs=[
                pl.BlockSpec(xp2.shape, lambda i: (0, 0, 0)),
                pl.BlockSpec(rf.shape, lambda i: (0, 0, 0)),
                pl.BlockSpec(bcat.shape, lambda i: (0, 0)),
                pl.BlockSpec(r4.shape, lambda i: (0, 0, 0)),
                pl.BlockSpec(b4r.shape, lambda i: (0, 0)),
            ],
            out_specs=pl.BlockSpec((B * H, W * C), lambda i: (0, 0)),
        ),
        compiler_params=pltpu.CompilerParams(dimension_semantics=("arbitrary",)),
    )(xp2, rf, bcat, r4, b4r)

    out = out2d.reshape(B, H, W, C)                             # lane-dense slab back
    return jnp.transpose(out, (0, 3, 1, 2))                     # NHWC -> NCHW


# ----------------------------------------------------------------------------
# Pure-JAX reference (correctness check only)
# ----------------------------------------------------------------------------
def _reference(x_nchw, params):
    x = jnp.transpose(x_nchw, (0, 2, 3, 1))
    dn = ('NHWC', 'HWIO', 'NHWC')

    def conv(inp, w, b, pad):
        y = lax.conv_general_dilated(inp, w, window_strides=(1, 1),
                                     padding=[(pad, pad), (pad, pad)],
                                     dimension_numbers=dn)
        return jnp.maximum(y + b[0][None, None, None, :], 0.0)

    y1 = conv(x, params['w1'], params['b1'], 0)
    y2 = conv(x, params['w2'], params['b2'], 1)
    y3 = conv(x, params['w3'], params['b3'], 2)
    yc = jnp.concatenate([y1, y2, y3], axis=-1)
    y4 = conv(yc, params['w4'], params['b4'], 1)
    return jnp.transpose(y4, (0, 3, 1, 2))


def init_params(key, in_channels):
    """Deterministic synthetic parameters.  Weight layout (KH, KW, Cin, Cout)
    == transpose of PyTorch's (Cout, Cin, KH, KW)."""
    C = in_channels
    ks = jax.random.split(key, 8)
    scale = 0.1
    return {
        'w1': scale * jax.random.normal(ks[0], (1, 1, C, C), jnp.float32),
        'w2': scale * jax.random.normal(ks[1], (3, 3, C, C), jnp.float32),
        'w3': scale * jax.random.normal(ks[2], (5, 5, C, C), jnp.float32),
        'w4': scale * jax.random.normal(ks[3], (3, 3, 3 * C, C), jnp.float32),
        'b1': scale * jax.random.normal(ks[4], (1, C), jnp.float32),
        'b2': scale * jax.random.normal(ks[5], (1, C), jnp.float32),
        'b3': scale * jax.random.normal(ks[6], (1, C), jnp.float32),
        'b4': scale * jax.random.normal(ks[7], (1, C), jnp.float32),
    }


if __name__ == "__main__":
    key = jax.random.PRNGKey(0)
    k_x, k_p = jax.random.split(key)

    B, C, H, W = 2, 8, 16, 16                    # small shapes (in_channels=8)
    x = jax.random.normal(k_x, (B, C, H, W), jnp.float32)
    params = init_params(k_p, C)

    out = multi_scale_cnn(x, params)
    out = jax.block_until_ready(out)

    ref = _reference(x, params)
    assert out.shape == (B, C, H, W)
    assert jnp.allclose(out, ref, atol=1e-4, rtol=1e-4), "Pallas output mismatch vs reference"

    print("KERNEL_OK")
</pallas_src>

<mosaic_0001>
module attributes {stable_mosaic.version = 11 : i64} {
  func.func @_mscnn_kernel(%arg0: i32, %arg1: memref<2x20x160xf32, #tpu.memory_space<vmem>>, %arg2: memref<5x160x384xf32, #tpu.memory_space<vmem>>, %arg3: memref<1x384xf32, #tpu.memory_space<vmem>>, %arg4: memref<3x384x128xf32, #tpu.memory_space<vmem>>, %arg5: memref<1x128xf32, #tpu.memory_space<vmem>>, %arg6: memref<32x128xf32, #tpu.memory_space<vmem>>) attributes {dimension_semantics = [#tpu.dimension_semantics<arbitrary>], iteration_bounds = array<i64: 1>, scalar_prefetch = 0 : i64, scratch_operands = 0 : i64, tpu.core_type = #tpu.core_type<tc>, window_params = [{pipeline_mode = #tpu.pipeline_mode<synchronous>, transform_indices = @transform_0, window_bounds = array<i64: 2, 20, 160>}, {pipeline_mode = #tpu.pipeline_mode<synchronous>, transform_indices = @transform_1, window_bounds = array<i64: 5, 160, 384>}, {pipeline_mode = #tpu.pipeline_mode<synchronous>, transform_indices = @transform_2, window_bounds = array<i64: 1, 384>}, {pipeline_mode = #tpu.pipeline_mode<synchronous>, transform_indices = @transform_3, window_bounds = array<i64: 3, 384, 128>}, {pipeline_mode = #tpu.pipeline_mode<synchronous>, transform_indices = @transform_4, window_bounds = array<i64: 1, 128>}, {pipeline_mode = #tpu.pipeline_mode<synchronous>, transform_indices = @transform_5, window_bounds = array<i64: 32, 128>}]} {
    %cst = arith.constant 0.000000e+00 : f32
    %0 = vector.broadcast %cst : f32 to vector<32x384xf32>
    %c0 = arith.constant 0 : index
    %c0_0 = arith.constant 0 : index
    %c0_1 = arith.constant 0 : index
    %1 = vector.load %arg1[%c0, %c0_0, %c0_1] : memref<2x20x160xf32, #tpu.memory_space<vmem>>, vector<2x16x160xf32>
    %2 = vector.shape_cast %1 : vector<2x16x160xf32> to vector<32x160xf32>
    %c0_2 = arith.constant 0 : index
    %c0_3 = arith.constant 0 : index
    %c0_4 = arith.constant 0 : index
    %3 = vector.load %arg2[%c0_2, %c0_3, %c0_4] : memref<5x160x384xf32, #tpu.memory_space<vmem>>, vector<1x160x384xf32>
    %4 = vector.shape_cast %3 : vector<1x160x384xf32> to vector<160x384xf32>
    %cst_5 = arith.constant dense<0.000000e+00> : vector<32x384xf32>
    %5 = tpu.matmul %2, %4, %cst_5 {dimension_numbers = #tpu.dot_dimension_numbers<[1], [0], [0], [1], [0, 0, 1, 1], [], []>} : vector<32x160xf32>, vector<160x384xf32>, vector<32x384xf32> -> vector<32x384xf32>
    %6 = arith.addf %0, %5 : vector<32x384xf32>
    %c0_6 = arith.constant 0 : index
    %c1 = arith.constant 1 : index
    %c0_7 = arith.constant 0 : index
    %7 = vector.load %arg1[%c0_6, %c1, %c0_7] : memref<2x20x160xf32, #tpu.memory_space<vmem>>, vector<2x16x160xf32>
    %8 = vector.shape_cast %7 : vector<2x16x160xf32> to vector<32x160xf32>
    %c1_8 = arith.constant 1 : index
    %c0_9 = arith.constant 0 : index
    %c0_10 = arith.constant 0 : index
    %9 = vector.load %arg2[%c1_8, %c0_9, %c0_10] : memref<5x160x384xf32, #tpu.memory_space<vmem>>, vector<1x160x384xf32>
    %10 = vector.shape_cast %9 : vector<1x160x384xf32> to vector<160x384xf32>
    %cst_11 = arith.constant dense<0.000000e+00> : vector<32x384xf32>
    %11 = tpu.matmul %8, %10, %cst_11 {dimension_numbers = #tpu.dot_dimension_numbers<[1], [0], [0], [1], [0, 0, 1, 1], [], []>} : vector<32x160xf32>, vector<160x384xf32>, vector<32x384xf32> -> vector<32x384xf32>
    %12 = arith.addf %6, %11 : vector<32x384xf32>
    %c0_12 = arith.constant 0 : index
    %c2 = arith.constant 2 : index
    %c0_13 = arith.constant 0 : index
    %13 = vector.load %arg1[%c0_12, %c2, %c0_13] : memref<2x20x160xf32, #tpu.memory_space<vmem>>, vector<2x16x160xf32>
    %14 = vector.shape_cast %13 : vector<2x16x160xf32> to vector<32x160xf32>
    %c2_14 = arith.constant 2 : index
    %c0_15 = arith.constant 0 : index
    %c0_16 = arith.constant 0 : index
    %15 = vector.load %arg2[%c2_14, %c0_15, %c0_16] : memref<5x160x384xf32, #tpu.memory_space<vmem>>, vector<1x160x384xf32>
    %16 = vector.shape_cast %15 : vector<1x160x384xf32> to vector<160x384xf32>
    %cst_17 = arith.constant dense<0.000000e+00> : vector<32x384xf32>
    %17 = tpu.matmul %14, %16, %cst_17 {dimension_numbers = #tpu.dot_dimension_numbers<[1], [0], [0], [1], [0, 0, 1, 1], [], []>} : vector<32x160xf32>, vector<160x384xf32>, vector<32x384xf32> -> vector<32x384xf32>
    %18 = arith.addf %12, %17 : vector<32x384xf32>
    %c0_18 = arith.constant 0 : index
    %c3 = arith.constant 3 : index
    %c0_19 = arith.constant 0 : index
    %19 = vector.load %arg1[%c0_18, %c3, %c0_19] : memref<2x20x160xf32, #tpu.memory_space<vmem>>, vector<2x16x160xf32>
    %20 = vector.shape_cast %19 : vector<2x16x160xf32> to vector<32x160xf32>
    %c3_20 = arith.constant 3 : index
    %c0_21 = arith.constant 0 : index
    %c0_22 = arith.constant 0 : index
    %21 = vector.load %arg2[%c3_20, %c0_21, %c0_22] : memref<5x160x384xf32, #tpu.memory_space<vmem>>, vector<1x160x384xf32>
    %22 = vector.shape_cast %21 : vector<1x160x384xf32> to vector<160x384xf32>
    %cst_23 = arith.constant dense<0.000000e+00> : vector<32x384xf32>
    %23 = tpu.matmul %20, %22, %cst_23 {dimension_numbers = #tpu.dot_dimension_numbers<[1], [0], [0], [1], [0, 0, 1, 1], [], []>} : vector<32x160xf32>, vector<160x384xf32>, vector<32x384xf32> -> vector<32x384xf32>
    %24 = arith.addf %18, %23 : vector<32x384xf32>
    %c0_24 = arith.constant 0 : index
    %c4 = arith.constant 4 : index
    %c0_25 = arith.constant 0 : index
    %25 = vector.load %arg1[%c0_24, %c4, %c0_25] : memref<2x20x160xf32, #tpu.memory_space<vmem>>, vector<2x16x160xf32>
    %26 = vector.shape_cast %25 : vector<2x16x160xf32> to vector<32x160xf32>
    %c4_26 = arith.constant 4 : index
    %c0_27 = arith.constant 0 : index
    %c0_28 = arith.constant 0 : index
    %27 = vector.load %arg2[%c4_26, %c0_27, %c0_28] : memref<5x160x384xf32, #tpu.memory_space<vmem>>, vector<1x160x384xf32>
    %28 = vector.shape_cast %27 : vector<1x160x384xf32> to vector<160x384xf32>
    %cst_29 = arith.constant dense<0.000000e+00> : vector<32x384xf32>
    %29 = tpu.matmul %26, %28, %cst_29 {dimension_numbers = #tpu.dot_dimension_numbers<[1], [0], [0], [1], [0, 0, 1, 1], [], []>} : vector<32x160xf32>, vector<160x384xf32>, vector<32x384xf32> -> vector<32x384xf32>
    %30 = arith.addf %24, %29 : vector<32x384xf32>
    %c0_30 = arith.constant 0 : index
    %c0_31 = arith.constant 0 : index
    %31 = vector.load %arg3[%c0_30, %c0_31] : memref<1x384xf32, #tpu.memory_space<vmem>>, vector<1x384xf32>
    %32 = vector.broadcast %31 : vector<1x384xf32> to vector<32x384xf32>
    %33 = arith.addf %30, %32 : vector<32x384xf32>
    %cst_32 = arith.constant 0.000000e+00 : f32
    %34 = vector.broadcast %cst_32 : f32 to vector<32x384xf32>
    %35 = arith.maximumf %33, %34 : vector<32x384xf32>
    %cst_33 = arith.constant 0.000000e+00 : f32
    %36 = vector.broadcast %cst_33 : f32 to vector<2x1x384xf32>
    %37 = vector.shape_cast %35 : vector<32x384xf32> to vector<2x16x384xf32>
    %38 = tpu.concatenate %36, %37, %36 in 1 : vector<2x1x384xf32>, vector<2x16x384xf32>, vector<2x1x384xf32> -> vector<2x18x384xf32>
    %cst_34 = arith.constant 0.000000e+00 : f32
    %39 = vector.broadcast %cst_34 : f32 to vector<32x128xf32>
    %40 = vector.extract_strided_slice %38 {offsets = [0, 0, 0], sizes = [2, 16, 384], strides = [1, 1, 1]} : vector<2x18x384xf32> to vector<2x16x384xf32>
    %41 = vector.shape_cast %40 : vector<2x16x384xf32> to vector<32x384xf32>
    %c0_35 = arith.constant 0 : index
    %c0_36 = arith.constant 0 : index
    %c0_37 = arith.constant 0 : index
    %42 = vector.load %arg4[%c0_35, %c0_36, %c0_37] : memref<3x384x128xf32, #tpu.memory_space<vmem>>, vector<1x384x128xf32>
    %43 = vector.shape_cast %42 : vector<1x384x128xf32> to vector<384x128xf32>
    %cst_38 = arith.constant dense<0.000000e+00> : vector<32x128xf32>
    %44 = tpu.matmul %41, %43, %cst_38 {dimension_numbers = #tpu.dot_dimension_numbers<[1], [0], [0], [1], [0, 0, 1, 1], [], []>} : vector<32x384xf32>, vector<384x128xf32>, vector<32x128xf32> -> vector<32x128xf32>
    %45 = arith.addf %39, %44 : vector<32x128xf32>
    %46 = vector.extract_strided_slice %38 {offsets = [0, 1, 0], sizes = [2, 16, 384], strides = [1, 1, 1]} : vector<2x18x384xf32> to vector<2x16x384xf32>
    %47 = vector.shape_cast %46 : vector<2x16x384xf32> to vector<32x384xf32>
    %c1_39 = arith.constant 1 : index
    %c0_40 = arith.constant 0 : index
    %c0_41 = arith.constant 0 : index
    %48 = vector.load %arg4[%c1_39, %c0_40, %c0_41] : memref<3x384x128xf32, #tpu.memory_space<vmem>>, vector<1x384x128xf32>
    %49 = vector.shape_cast %48 : vector<1x384x128xf32> to vector<384x128xf32>
    %cst_42 = arith.constant dense<0.000000e+00> : vector<32x128xf32>
    %50 = tpu.matmul %47, %49, %cst_42 {dimension_numbers = #tpu.dot_dimension_numbers<[1], [0], [0], [1], [0, 0, 1, 1], [], []>} : vector<32x384xf32>, vector<384x128xf32>, vector<32x128xf32> -> vector<32x128xf32>
    %51 = arith.addf %45, %50 : vector<32x128xf32>
    %52 = vector.extract_strided_slice %38 {offsets = [0, 2, 0], sizes = [2, 16, 384], strides = [1, 1, 1]} : vector<2x18x384xf32> to vector<2x16x384xf32>
    %53 = vector.shape_cast %52 : vector<2x16x384xf32> to vector<32x384xf32>
    %c2_43 = arith.constant 2 : index
    %c0_44 = arith.constant 0 : index
    %c0_45 = arith.constant 0 : index
    %54 = vector.load %arg4[%c2_43, %c0_44, %c0_45] : memref<3x384x128xf32, #tpu.memory_space<vmem>>, vector<1x384x128xf32>
    %55 = vector.shape_cast %54 : vector<1x384x128xf32> to vector<384x128xf32>
    %cst_46 = arith.constant dense<0.000000e+00> : vector<32x128xf32>
    %56 = tpu.matmul %53, %55, %cst_46 {dimension_numbers = #tpu.dot_dimension_numbers<[1], [0], [0], [1], [0, 0, 1, 1], [], []>} : vector<32x384xf32>, vector<384x128xf32>, vector<32x128xf32> -> vector<32x128xf32>
    %57 = arith.addf %51, %56 : vector<32x128xf32>
    %c0_47 = arith.constant 0 : index
    %c0_48 = arith.constant 0 : index
    %58 = vector.load %arg5[%c0_47, %c0_48] : memref<1x128xf32, #tpu.memory_space<vmem>>, vector<1x128xf32>
    %59 = vector.broadcast %58 : vector<1x128xf32> to vector<32x128xf32>
    %60 = arith.addf %57, %59 : vector<32x128xf32>
    %cst_49 = arith.constant 0.000000e+00 : f32
    %61 = vector.broadcast %cst_49 : f32 to vector<32x128xf32>
    %62 = arith.maximumf %60, %61 : vector<32x128xf32>
    %c0_50 = arith.constant 0 : index
    %c0_51 = arith.constant 0 : index
    %63 = vector.load %arg6[%c0_50, %c0_51] : memref<32x128xf32, #tpu.memory_space<vmem>>, vector<32x128xf32>
    tpu.vector_store %arg6[%c0_50, %c0_51], %62 {strides = array<i32>} : memref<32x128xf32, #tpu.memory_space<vmem>>, vector<32x128xf32>,
    return
  }
  func.func @transform_0(%arg0: i32) -> (i32, i32, i32) {
    %c0_i32 = arith.constant 0 : i32
    %c0_i32_0 = arith.constant 0 : i32
    %c0_i32_1 = arith.constant 0 : i32
    %c0_i32_2 = arith.constant 0 : i32
    return %c0_i32, %c0_i32_0, %c0_i32_1 : i32, i32, i32
  }
  func.func @transform_1(%arg0: i32) -> (i32, i32, i32) {
    %c0_i32 = arith.constant 0 : i32
    %c0_i32_0 = arith.constant 0 : i32
    %c0_i32_1 = arith.constant 0 : i32
    %c0_i32_2 = arith.constant 0 : i32
    return %c0_i32, %c0_i32_0, %c0_i32_1 : i32, i32, i32
  }
  func.func @transform_2(%arg0: i32) -> (i32, i32) {
    %c0_i32 = arith.constant 0 : i32
    %c0_i32_0 = arith.constant 0 : i32
    %c0_i32_1 = arith.constant 0 : i32
    return %c0_i32, %c0_i32_0 : i32, i32
  }
  func.func @transform_3(%arg0: i32) -> (i32, i32, i32) {
    %c0_i32 = arith.constant 0 : i32
    %c0_i32_0 = arith.constant 0 : i32
    %c0_i32_1 = arith.constant 0 : i32
    %c0_i32_2 = arith.constant 0 : i32
    return %c0_i32, %c0_i32_0, %c0_i32_1 : i32, i32, i32
  }
  func.func @transform_4(%arg0: i32) -> (i32, i32) {
    %c0_i32 = arith.constant 0 : i32
    %c0_i32_0 = arith.constant 0 : i32
    %c0_i32_1 = arith.constant 0 : i32
    return %c0_i32, %c0_i32_0 : i32, i32
  }
  func.func @transform_5(%arg0: i32) -> (i32, i32) {
    %c0_i32 = arith.constant 0 : i32
    %c0_i32_0 = arith.constant 0 : i32
    %c0_i32_1 = arith.constant 0 : i32
    return %c0_i32, %c0_i32_0 : i32, i32
  }
}

</mosaic_0001>

<llo_original>
// kernel: tile.12
$region0: #{tile.12}
  #allocation0 [shape = 's32[1]{0}', space=sflag, size = 0x4, scoped, tag = 'scoped memory for tile.12']
  %s0 = inlined_call_operand.vmem [shape: f32[24], index: 0, kind: input, shape index: {}]
  %s1 = inlined_call_operand.vmem [shape: f32[16,24], index: 1, kind: output, shape index: {}]
  // Predicated region
  $region2: #{tile.12} parent=0 // pred_check
    _
  $region3: #{tile.12} parent=0 // pred_check_branch
    %3 = sbr.rel (0) target = $region5
  $region4: #{tile.12} parent=0 // pred_region
    _
  $region5: #{tile.12} parent=0 // pred_fallthru
    _
  %v4 = vld [vmem:[%s0] ss:$0 sm:$0xff]
  %5 = vst [vmem:[%s1] sm:$0xff] %v4
  %s6 = scalar_lea.vmem %s1, 8
  %7 = vst [vmem:[%s6] sm:$0xff] %v4

// kernel: tile.16
$region0: #{tile.16}
  #allocation2 [shape = 's32[1]{0}', space=sflag, size = 0x4, scoped, tag = 'scoped memory for tile.16']
  %s0 = inlined_call_operand.hbm [shape: f32[8], index: 0, kind: input, shape index: {}]
  %s1 = inlined_call_operand.vmem [shape: f32[16,8], index: 1, kind: output, shape index: {}]
  $region1: #{tile.16} parent=0
    #allocation0 [shape = 'u8[512]{0}', space=vmem, size = 0x400, scoped, tag = 'operand span for operand 0']
    #allocation1 [shape = 's32[1]{0}', space=sflag, size = 0x4, scoped, tag = 'scoped memory for tile.16']
    %2 = vsyncpa [#allocation1], 0
    // Predicated region
    $region2: #{tile.16} parent=1 // pred_check
      _
    $region3: #{tile.16} parent=1 // pred_check_branch
      %4 = sbr.rel (0) target = $region5
    $region4: #{tile.16} parent=1 // pred_region
      %s6 = ssub.s32 16, 16
      %7 = vsyncadd [#allocation1], %s6
      %s9 = sshll.u32 [#allocation0], 4
      %s10 = int_to_ptr.vmem [resolvable:$true] %s9
      %12 = dma.hbm_to_vmem [thread:$0]  %s0, 16, %s10, [#allocation1]
    $region5: #{tile.16} parent=1 // pred_fallthru
      _
    // Predicated region
    $region6: #{tile.16} parent=1 // pred_check
      _
    $region7: #{tile.16} parent=1 // pred_check_branch
      %14 = sbr.rel (0) target = $region9
    $region8: #{tile.16} parent=1 // pred_region
      %15 = dma.done [#allocation1], 16
    $region9: #{tile.16} parent=1 // pred_fallthru
      _
    %v16 = vld [vmem:[#allocation0] ss:$0 sm:$0xff]
    %17 = vst [vmem:[%s1] sm:$0xff] %v16
    %s18 = scalar_lea.vmem %s1, 8
    %19 = vst [vmem:[%s18] sm:$0xff] %v16
    %20 = vsyncpa [#allocation1], 1

// kernel: tile.13
$region0: #{tile.13}
  %s0 = inlined_call_operand.vmem [shape: f32[16,24], index: 0, kind: input, shape index: {}]
  %s1 = inlined_call_operand.vmem [shape: f32[1,384], index: 1, kind: output, shape index: {}]
  $region1: #{tile.13} parent=0
    #allocation0 [shape = 'u8[12288]{0}', space=vmem, size = 0x3000, scoped, tag = 'scoped mem for output reshape']
    %v2 = vld [vmem:[%s0] sm:$0x1]
    %vm3 = vcmask 195584
    %4 = vst.msk [vmem:[#allocation0] sm:$0x1] %vm3, %v2
    %s5 = scalar_lea.vmem %s0, 5
    %v6 = vld [vmem:[%s5] sm:$0x1]
    %s7 = scalar_lea.vmem %s0, 5
    %v8 = vld [vmem:[%s7] sm:$0x1]
    %vm9 = vcmask 64512
    %v10 = vsel %vm9, %v8, %v6
    %11 = vrot.lane.b32.xlu0 %v10, 120
    %v12 = vpop.permute.xlu0 %11
    %vm13 = vcmask 130048
    %s14 = scalar_lea.vmem [#allocation0], 8
    %15 = vst.msk [vmem:[%s14] sm:$0x1] %vm13, %v12
    %vm16 = vcmask 1048512
    %17 = vst.msk [vmem:[#allocation0] sm:$0x1] %vm16, %v12
    %s18 = scalar_lea.vmem %s0, 10
    %v19 = vld [vmem:[%s18] sm:$0x1]
    %s20 = scalar_lea.vmem %s0, 10
    %v21 = vld [vmem:[%s20] sm:$0x1]
    %vm22 = vcmask 130048
    %v23 = vsel %vm22, %v21, %v19
    %24 = vrot.lane.b32.xlu0 %v23, 112
    %v25 = vpop.permute.xlu0 %24
    %vm26 = vcmask 64512
    %s27 = scalar_lea.vmem [#allocation0], 16
    %28 = vst.msk [vmem:[%s27] sm:$0x1] %vm26, %v25
    %vm29 = vcmask 1048448
    %s30 = scalar_lea.vmem [#allocation0], 8
    %31 = vst.msk [vmem:[%s30] sm:$0x1] %vm29, %v25
    %s32 = scalar_lea.vmem %s0, 15
    %v33 = vld [vmem:[%s32] sm:$0x1]
    %34 = vrot.lane.b32.xlu0 %v33, 104
    %v35 = vpop.permute.xlu0 %34
    %vm36 = vcmask 1048384
    %s37 = scalar_lea.vmem [#allocation0], 16
    %38 = vst.msk [vmem:[%s37] sm:$0x1] %vm36, %v35
    %s39 = scalar_lea.vmem %s0, 4
    %v40 = vld [vmem:[%s39] sm:$0x1]
    %41 = vrot.lane.b32.xlu0 %v40, 96
    %v42 = vpop.permute.xlu0 %41
    %vm43 = vcmask 982784
    %44 = vst.msk [vmem:[#allocation0] sm:$0x1] %vm43, %v42
    %s45 = scalar_lea.vmem %s0, 9
    %v46 = vld [vmem:[%s45] sm:$0x1]
    %47 = vrot.lane.b32.xlu0 %v46, 88
    %v48 = vpop.permute.xlu0 %47
    %vm49 = vcmask 917184
    %s50 = scalar_lea.vmem [#allocation0], 8
    %51 = vst.msk [vmem:[%s50] sm:$0x1] %vm49, %v48
    %s52 = scalar_lea.vmem %s0, 14
    %v53 = vld [vmem:[%s52] sm:$0x1]
    %54 = vrot.lane.b32.xlu0 %v53, 80
    %v55 = vpop.permute.xlu0 %54
    %vm56 = vcmask 851584
    %s57 = scalar_lea.vmem [#allocation0], 16
    %58 = vst.msk [vmem:[%s57] sm:$0x1] %vm56, %v55
    %s59 = scalar_lea.vmem %s0, 3
    %v60 = vld [vmem:[%s59] sm:$0x1]
    %61 = vrot.lane.b32.xlu0 %v60, 72
    %v62 = vpop.permute.xlu0 %61
    %vm63 = vcmask 785984
    %64 = vst.msk [vmem:[#allocation0] sm:$0x1] %vm63, %v62
    %s65 = scalar_lea.vmem %s0, 8
    %v66 = vld [vmem:[%s65] sm:$0x1]
    %67 = vrot.lane.b32.xlu0 %v66, 64
    %v68 = vpop.permute.xlu0 %67
    %vm69 = vcmask 720384
    %s70 = scalar_lea.vmem [#allocation0], 8
    %71 = vst.msk [vmem:[%s70] sm:$0x1] %vm69, %v68
    %s72 = scalar_lea.vmem %s0, 13
    %v73 = vld [vmem:[%s72] sm:$0x1]
    %74 = vrot.lane.b32.xlu0 %v73, 56
    %v75 = vpop.permute.xlu0 %74
    %vm76 = vcmask 654784
    %s77 = scalar_lea.vmem [#allocation0], 16
    %78 = vst.msk [vmem:[%s77] sm:$0x1] %vm76, %v75
    %s79 = scalar_lea.vmem %s0, 2
    %v80 = vld [vmem:[%s79] sm:$0x1]
    %81 = vrot.lane.b32.xlu0 %v80, 48
    %v82 = vpop.permute.xlu0 %81
    %vm83 = vcmask 589184
    %84 = vst.msk [vmem:[#allocation0] sm:$0x1] %vm83, %v82
    %s85 = scalar_lea.vmem %s0, 7
    %v86 = vld [vmem:[%s85] sm:$0x1]
    %87 = vrot.lane.b32.xlu0 %v86, 40
    %v88 = vpop.permute.xlu0 %87
    %vm89 = vcmask 523584
    %s90 = scalar_lea.vmem [#allocation0], 8
    %91 = vst.msk [vmem:[%s90] sm:$0x1] %vm89, %v88
    %s92 = scalar_lea.vmem %s0, 12
    %v93 = vld [vmem:[%s92] sm:$0x1]
    %94 = vrot.lane.b32.xlu0 %v93, 32
    %v95 = vpop.permute.xlu0 %94
    %vm96 = vcmask 457984
    %s97 = scalar_lea.vmem [#allocation0], 16
    %98 = vst.msk [vmem:[%s97] sm:$0x1] %vm96, %v95
    %s99 = scalar_lea.vmem %s0, 1
    %v100 = vld [vmem:[%s99] sm:$0x1]
    %101 = vrot.lane.b32.xlu0 %v100, 24
    %v102 = vpop.permute.xlu0 %101
    %vm103 = vcmask 392384
    %104 = vst.msk [vmem:[#allocation0] sm:$0x1] %vm103, %v102
    %s105 = scalar_lea.vmem %s0, 6
    %v106 = vld [vmem:[%s105] sm:$0x1]
    %107 = vrot.lane.b32.xlu0 %v106, 16
    %v108 = vpop.permute.xlu0 %107
    %vm109 = vcmask 326784
    %s110 = scalar_lea.vmem [#allocation0], 8
    %111 = vst.msk [vmem:[%s110] sm:$0x1] %vm109, %v108
    %s112 = scalar_lea.vmem %s0, 11
    %v113 = vld [vmem:[%s112] sm:$0x1]
    %114 = vrot.lane.b32.xlu0 %v113, 8
    %v115 = vpop.permute.xlu0 %114
    %vm116 = vcmask 261184
    %s117 = scalar_lea.vmem [#allocation0], 16
    %118 = vst.msk [vmem:[%s117] sm:$0x1] %vm116, %v115
    %s120 = sshll.u32 1, 1
    %s121 = ssub.s32 %s120, 1
    %v123 = vld [vmem:[#allocation0] sm:%s121]
    %s124 = sshll.u32 1, 1
    %s125 = ssub.s32 %s124, 1
    %126 = vst [vmem:[%s1] sm:%s125] %v123
    %s127 = scalar_lea.vmem [#allocation0], 8
    %v128 = vld [vmem:[%s127] sm:%s121]
    %s129 = sshll.u32 1, 1
    %s130 = ssub.s32 %s129, 1
    %s131 = scalar_lea.vmem %s1, 1
    %132 = vst [vmem:[%s131] sm:%s130] %v128
    %s133 = scalar_lea.vmem [#allocation0], 16
    %v134 = vld [vmem:[%s133] sm:%s121]
    %s135 = sshll.u32 1, 1
    %s136 = ssub.s32 %s135, 1
    %s137 = smul.addr 1, 2
    %s138 = scalar_lea.vmem %s1, %s137
    %139 = vst [vmem:[%s138] sm:%s136] %v134

// kernel: tile.17
$region0: #{tile.17}
  %s0 = inlined_call_operand.vmem [shape: f32[16,8], index: 0, kind: input, shape index: {}]
  %s1 = inlined_call_operand.vmem [shape: f32[1,128], index: 1, kind: output, shape index: {}]
  $region1: #{tile.17} parent=0
    #allocation0 [shape = 'u8[4096]{0}', space=vmem, size = 0x1000, scoped, tag = 'scoped mem for output reshape']
    %v2 = vld [vmem:[%s0] sm:$0x1]
    %vm3 = vcmask 64512
    %4 = vst.msk [vmem:[#allocation0] sm:$0x1] %vm3, %v2
    %s5 = scalar_lea.vmem %s0, 15
    %v6 = vld [vmem:[%s5] sm:$0x1]
    %7 = vrot.lane.b32.xlu0 %v6, 120
    %v8 = vpop.permute.xlu0 %7
    %vm9 = vcmask 1048512
    %10 = vst.msk [vmem:[#allocation0] sm:$0x1] %vm9, %v8
    %s11 = scalar_lea.vmem %s0, 14
    %v12 = vld [vmem:[%s11] sm:$0x1]
    %13 = vrot.lane.b32.xlu0 %v12, 112
    %v14 = vpop.permute.xlu0 %13
    %vm15 = vcmask 982912
    %16 = vst.msk [vmem:[#allocation0] sm:$0x1] %vm15, %v14
    %s17 = scalar_lea.vmem %s0, 13
    %v18 = vld [vmem:[%s17] sm:$0x1]
    %19 = vrot.lane.b32.xlu0 %v18, 104
    %v20 = vpop.permute.xlu0 %19
    %vm21 = vcmask 917312
    %22 = vst.msk [vmem:[#allocation0] sm:$0x1] %vm21, %v20
    %s23 = scalar_lea.vmem %s0, 12
    %v24 = vld [vmem:[%s23] sm:$0x1]
    %25 = vrot.lane.b32.xlu0 %v24, 96
    %v26 = vpop.permute.xlu0 %25
    %vm27 = vcmask 851712
    %28 = vst.msk [vmem:[#allocation0] sm:$0x1] %vm27, %v26
    %s29 = scalar_lea.vmem %s0, 11
    %v30 = vld [vmem:[%s29] sm:$0x1]
    %31 = vrot.lane.b32.xlu0 %v30, 88
    %v32 = vpop.permute.xlu0 %31
    %vm33 = vcmask 786112
    %34 = vst.msk [vmem:[#allocation0] sm:$0x1] %vm33, %v32
    %s35 = scalar_lea.vmem %s0, 10
    %v36 = vld [vmem:[%s35] sm:$0x1]
    %37 = vrot.lane.b32.xlu0 %v36, 80
    %v38 = vpop.permute.xlu0 %37
    %vm39 = vcmask 720512
    %40 = vst.msk [vmem:[#allocation0] sm:$0x1] %vm39, %v38
    %s41 = scalar_lea.vmem %s0, 9
    %v42 = vld [vmem:[%s41] sm:$0x1]
    %43 = vrot.lane.b32.xlu0 %v42, 72
    %v44 = vpop.permute.xlu0 %43
    %vm45 = vcmask 654912
    %46 = vst.msk [vmem:[#allocation0] sm:$0x1] %vm45, %v44
    %s47 = scalar_lea.vmem %s0, 8
    %v48 = vld [vmem:[%s47] sm:$0x1]
    %49 = vrot.lane.b32.xlu0 %v48, 64
    %v50 = vpop.permute.xlu0 %49
    %vm51 = vcmask 589312
    %52 = vst.msk [vmem:[#allocation0] sm:$0x1] %vm51, %v50
    %s53 = scalar_lea.vmem %s0, 7
    %v54 = vld [vmem:[%s53] sm:$0x1]
    %55 = vrot.lane.b32.xlu0 %v54, 56
    %v56 = vpop.permute.xlu0 %55
    %vm57 = vcmask 523712
    %58 = vst.msk [vmem:[#allocation0] sm:$0x1] %vm57, %v56
    %s59 = scalar_lea.vmem %s0, 6
    %v60 = vld [vmem:[%s59] sm:$0x1]
    %61 = vrot.lane.b32.xlu0 %v60, 48
    %v62 = vpop.permute.xlu0 %61
    %vm63 = vcmask 458112
    %64 = vst.msk [vmem:[#allocation0] sm:$0x1] %vm63, %v62
    %s65 = scalar_lea.vmem %s0, 5
    %v66 = vld [vmem:[%s65] sm:$0x1]
    %67 = vrot.lane.b32.xlu0 %v66, 40
    %v68 = vpop.permute.xlu0 %67
    %vm69 = vcmask 392512
    %70 = vst.msk [vmem:[#allocation0] sm:$0x1] %vm69, %v68
    %s71 = scalar_lea.vmem %s0, 4
    %v72 = vld [vmem:[%s71] sm:$0x1]
    %73 = vrot.lane.b32.xlu0 %v72, 32
    %v74 = vpop.permute.xlu0 %73
    %vm75 = vcmask 326912
    %76 = vst.msk [vmem:[#allocation0] sm:$0x1] %vm75, %v74
    %s77 = scalar_lea.vmem %s0, 3
    %v78 = vld [vmem:[%s77] sm:$0x1]
    %79 = vrot.lane.b32.xlu0 %v78, 24
    %v80 = vpop.permute.xlu0 %79
    %vm81 = vcmask 261312
    %82 = vst.msk [vmem:[#allocation0] sm:$0x1] %vm81, %v80
    %s83 = scalar_lea.vmem %s0, 2
    %v84 = vld [vmem:[%s83] sm:$0x1]
    %85 = vrot.lane.b32.xlu0 %v84, 16
    %v86 = vpop.permute.xlu0 %85
    %vm87 = vcmask 195712
    %88 = vst.msk [vmem:[#allocation0] sm:$0x1] %vm87, %v86
    %s89 = scalar_lea.vmem %s0, 1
    %v90 = vld [vmem:[%s89] sm:$0x1]
    %91 = vrot.lane.b32.xlu0 %v90, 8
    %v92 = vpop.permute.xlu0 %91
    %vm93 = vcmask 130112
    %94 = vst.msk [vmem:[#allocation0] sm:$0x1] %vm93, %v92
    %s96 = sshll.u32 1, 1
    %s97 = ssub.s32 %s96, 1
    %v99 = vld [vmem:[#allocation0] sm:%s97]
    %s100 = sshll.u32 1, 1
    %s101 = ssub.s32 %s100, 1
    %102 = vst [vmem:[%s1] sm:%s101] %v99

// kernel: multi_scale_cnn.1
$region0: #{multi_scale_cnn.1}
  #allocation0 [shape = 'u32[]', space=smem, size = 0x4, offset = 0x4, fixed_abs, tag = 'smem constant byte address 0x4 - core index']
  #allocation1 [shape = 'u32[144,128]{1,0:T(1,128)}', space=vmem, size = 0x12000, scoped, tag = 'internal scratch']
  %s0 = inlined_call_operand.vmem [shape: f32[2,20,160], index: 0, kind: input, shape index: {}]
  %s1 = inlined_call_operand.vmem [shape: f32[5,160,384], index: 1, kind: input, shape index: {}]
  %s2 = inlined_call_operand.vmem [shape: f32[1,384], index: 2, kind: input, shape index: {}]
  %s3 = inlined_call_operand.vmem [shape: f32[3,384,128], index: 3, kind: input, shape index: {}]
  %s4 = inlined_call_operand.vmem [shape: f32[1,128], index: 4, kind: input, shape index: {}]
  %s5 = inlined_call_operand.vmem [shape: f32[32,128], index: 5, kind: output, shape index: {}]
  %s6 = sld [smem:[#allocation0]]
  $region30: #{multi_scale_cnn.1} parent=0
    _
  %s8 = ssub.s32 1, %s6
  %s9 = scalar_select 0, %s8, %s6
  // Predicated region
  $region2: #{multi_scale_cnn.1} parent=0 // pred_check
    _
  $region3: #{multi_scale_cnn.1} parent=0 // pred_check_branch
    %11 = sbr.rel (0) target = $region5
  $region4: #{multi_scale_cnn.1} parent=0 // pred_region
    _
  $region5: #{multi_scale_cnn.1} parent=0 // pred_fallthru
    _
  // Predicated region
  $region6: #{multi_scale_cnn.1} parent=0 // pred_check
    _
  $region7: #{multi_scale_cnn.1} parent=0 // pred_check_branch
    %13 = sbr.rel (0) target = $region9
  $region8: #{multi_scale_cnn.1} parent=0 // pred_region
    _
  $region9: #{multi_scale_cnn.1} parent=0 // pred_fallthru
    _
  // Predicated region
  $region10: #{multi_scale_cnn.1} parent=0 // pred_check
    _
  $region11: #{multi_scale_cnn.1} parent=0 // pred_check_branch
    %15 = sbr.rel (0) target = $region13
  $region12: #{multi_scale_cnn.1} parent=0 // pred_region
    _
  $region13: #{multi_scale_cnn.1} parent=0 // pred_fallthru
    _
  // Predicated region
  $region14: #{multi_scale_cnn.1} parent=0 // pred_check
    _
  $region15: #{multi_scale_cnn.1} parent=0 // pred_check_branch
    %17 = sbr.rel (0) target = $region17
  $region16: #{multi_scale_cnn.1} parent=0 // pred_region
    _
  $region17: #{multi_scale_cnn.1} parent=0 // pred_fallthru
    _
  // Predicated region
  $region18: #{multi_scale_cnn.1} parent=0 // pred_check
    _
  $region19: #{multi_scale_cnn.1} parent=0 // pred_check_branch
    %19 = sbr.rel (0) target = $region21
  $region20: #{multi_scale_cnn.1} parent=0 // pred_region
    _
  $region21: #{multi_scale_cnn.1} parent=0 // pred_fallthru
    _
  %v20 = vld [vmem:[%s0] sm:$0xff]
  %v21 = vld [vmem:[%s0 + $0x8] sm:$0xff]
  %v22 = vld [vmem:[%s0 + $0x10] sm:$0xff]
  %v23 = vld [vmem:[%s0 + $0x18] sm:$0xff]
  %v24 = vld [vmem:[%s0 + $0x30] sm:$0xff]
  %v25 = vld [vmem:[%s0 + $0x38] sm:$0xff]
  %v26 = vld [vmem:[%s0 + $0x40] sm:$0xff]
  %v27 = vld [vmem:[%s0 + $0x48] sm:$0xff]
  %v28 = vld [vmem:[%s1] sm:$0xff]
  %v29 = vld [vmem:[%s1 + $0x8] sm:$0xff]
  %v30 = vld [vmem:[%s1 + $0x10] sm:$0xff]
  %v31 = vld [vmem:[%s1 + $0x18] sm:$0xff]
  %v32 = vld [vmem:[%s1 + $0x20] sm:$0xff]
  %v33 = vld [vmem:[%s1 + $0x28] sm:$0xff]
  %v34 = vld [vmem:[%s1 + $0x30] sm:$0xff]
  %v35 = vld [vmem:[%s1 + $0x38] sm:$0xff]
  %v36 = vld [vmem:[%s1 + $0x40] sm:$0xff]
  %v37 = vld [vmem:[%s1 + $0x48] sm:$0xff]
  %v38 = vld [vmem:[%s1 + $0x50] sm:$0xff]
  %v39 = vld [vmem:[%s1 + $0x58] sm:$0xff]
  %v40 = vld [vmem:[%s1 + $0x60] sm:$0xff]
  %v41 = vld [vmem:[%s1 + $0x68] sm:$0xff]
  %v42 = vld [vmem:[%s1 + $0x70] sm:$0xff]
  %v43 = vld [vmem:[%s1 + $0x78] sm:$0xff]
  %v44 = vld [vmem:[%s1 + $0x80] sm:$0xff]
  %v45 = vld [vmem:[%s1 + $0x88] sm:$0xff]
  %v46 = vld [vmem:[%s1 + $0x90] sm:$0xff]
  %v47 = vld [vmem:[%s1 + $0x98] sm:$0xff]
  %v48 = vld [vmem:[%s1 + $0xa0] sm:$0xff]
  %v49 = vld [vmem:[%s1 + $0xa8] sm:$0xff]
  %v50 = vld [vmem:[%s1 + $0xb0] sm:$0xff]
  %v51 = vld [vmem:[%s1 + $0xb8] sm:$0xff]
  %v52 = vld [vmem:[%s1 + $0xc0] sm:$0xff]
  %v53 = vld [vmem:[%s1 + $0xc8] sm:$0xff]
  %v54 = vld [vmem:[%s1 + $0xd0] sm:$0xff]
  %v55 = vld [vmem:[%s1 + $0xd8] sm:$0xff]
  %v56 = vld [vmem:[%s1 + $0xe0] sm:$0xff]
  %v57 = vld [vmem:[%s1 + $0xe8] sm:$0xff]
  %v58 = vld [vmem:[%s1 + $0xf0] sm:$0xff]
  %v59 = vld [vmem:[%s1 + $0xf8] sm:$0xff]
  %v60 = vld [vmem:[%s1 + $0x100] sm:$0xff]
  %v61 = vld [vmem:[%s1 + $0x108] sm:$0xff]
  %v62 = vld [vmem:[%s1 + $0x110] sm:$0xff]
  %v63 = vld [vmem:[%s1 + $0x118] sm:$0xff]
  %v64 = vld [vmem:[%s1 + $0x120] sm:$0xff]
  %v65 = vld [vmem:[%s1 + $0x128] sm:$0xff]
  %v66 = vld [vmem:[%s1 + $0x130] sm:$0xff]
  %v67 = vld [vmem:[%s1 + $0x138] sm:$0xff]
  %v68 = vld [vmem:[%s1 + $0x140] sm:$0xff]
  %v69 = vld [vmem:[%s1 + $0x148] sm:$0xff]
  %v70 = vld [vmem:[%s1 + $0x150] sm:$0xff]
  %v71 = vld [vmem:[%s1 + $0x158] sm:$0xff]
  %v72 = vld [vmem:[%s1 + $0x160] sm:$0xff]
  %v73 = vld [vmem:[%s1 + $0x168] sm:$0xff]
  %v74 = vld [vmem:[%s1 + $0x170] sm:$0xff]
  %v75 = vld [vmem:[%s1 + $0x178] sm:$0xff]
  %v76 = vld [vmem:[%s1 + $0x180] sm:$0xff]
  %v77 = vld [vmem:[%s1 + $0x188] sm:$0xff]
  %v78 = vld [vmem:[%s1 + $0x190] sm:$0xff]
  %v79 = vld [vmem:[%s1 + $0x198] sm:$0xff]
  %v80 = vld [vmem:[%s1 + $0x1a0] sm:$0xff]
  %v81 = vld [vmem:[%s1 + $0x1a8] sm:$0xff]
  %v82 = vld [vmem:[%s1 + $0x1b0] sm:$0xff]
  %v83 = vld [vmem:[%s1 + $0x1b8] sm:$0xff]
  %v84 = vld [vmem:[%s1 + $0x1c0] sm:$0xff]
  %v85 = vld [vmem:[%s1 + $0x1c8] sm:$0xff]
  %v86 = vld [vmem:[%s1 + $0x1d0] sm:$0xff]
  %v87 = vld [vmem:[%s1 + $0x1d8] sm:$0xff]
  %v88 = vld [vmem:[%s0] sm:$0xfe]
  %v89 = vld [vmem:[%s0 + $0x8] sm:$0xfe]
  %v90 = vld [vmem:[%s0 + $0x20] sm:$0x1]
  %v91 = vld [vmem:[%s0 + $0x28] sm:$0x1]
  %v92 = vld [vmem:[%s0 + $0x30] sm:$0xfe]
  %v93 = vld [vmem:[%s0 + $0x38] sm:$0xfe]
  %v94 = vld [vmem:[%s0 + $0x50] sm:$0x1]
  %v95 = vld [vmem:[%s0 + $0x58] sm:$0x1]
  %vm108 = vcmask 1046528
  %v109 = vrot.slane %v88, 1
  %v110 = vrot.slane %v22, 1
  %v111 = vsel %vm108, %v109, %v110
  %v112 = vrot.slane %v89, 1
  %v113 = vrot.slane %v23, 1
  %v114 = vsel %vm108, %v112, %v113
  %v115 = vrot.slane %v90, 1
  %v116 = vsel %vm108, %v110, %v115
  %v117 = vrot.slane %v91, 1
  %v118 = vsel %vm108, %v113, %v117
  %v119 = vrot.slane %v92, 1
  %v120 = vrot.slane %v26, 1
  %v121 = vsel %vm108, %v119, %v120
  %v122 = vrot.slane %v93, 1
  %v123 = vrot.slane %v27, 1
  %v124 = vsel %vm108, %v122, %v123
  %v125 = vrot.slane %v94, 1
  %v126 = vsel %vm108, %v120, %v125
  %v127 = vrot.slane %v95, 1
  %v128 = vsel %vm108, %v123, %v127
  %s133 = scalar_lea.vmem %s1, 480
  %v134 = vld [vmem:[%s133] sm:$0xff]
  %v135 = vld [vmem:[%s133 + $0x8] sm:$0xff]
  %v136 = vld [vmem:[%s133 + $0x10] sm:$0xff]
  %v137 = vld [vmem:[%s133 + $0x18] sm:$0xff]
  %v138 = vld [vmem:[%s133 + $0x20] sm:$0xff]
  %v139 = vld [vmem:[%s133 + $0x28] sm:$0xff]
  %v140 = vld [vmem:[%s133 + $0x30] sm:$0xff]
  %v141 = vld [vmem:[%s133 + $0x38] sm:$0xff]
  %v142 = vld [vmem:[%s133 + $0x40] sm:$0xff]
  %v143 = vld [vmem:[%s133 + $0x48] sm:$0xff]
  %v144 = vld [vmem:[%s133 + $0x50] sm:$0xff]
  %v145 = vld [vmem:[%s133 + $0x58] sm:$0xff]
  %v146 = vld [vmem:[%s133 + $0x60] sm:$0xff]
  %v147 = vld [vmem:[%s133 + $0x68] sm:$0xff]
  %v148 = vld [vmem:[%s133 + $0x70] sm:$0xff]
  %v149 = vld [vmem:[%s133 + $0x78] sm:$0xff]
  %v150 = vld [vmem:[%s133 + $0x80] sm:$0xff]
  %v151 = vld [vmem:[%s133 + $0x88] sm:$0xff]
  %v152 = vld [vmem:[%s133 + $0x90] sm:$0xff]
  %v153 = vld [vmem:[%s133 + $0x98] sm:$0xff]
  %v154 = vld [vmem:[%s133 + $0xa0] sm:$0xff]
  %v155 = vld [vmem:[%s133 + $0xa8] sm:$0xff]
  %v156 = vld [vmem:[%s133 + $0xb0] sm:$0xff]
  %v157 = vld [vmem:[%s133 + $0xb8] sm:$0xff]
  %v158 = vld [vmem:[%s133 + $0xc0] sm:$0xff]
  %v159 = vld [vmem:[%s133 + $0xc8] sm:$0xff]
  %v160 = vld [vmem:[%s133 + $0xd0] sm:$0xff]
  %v161 = vld [vmem:[%s133 + $0xd8] sm:$0xff]
  %v162 = vld [vmem:[%s133 + $0xe0] sm:$0xff]
  %v163 = vld [vmem:[%s133 + $0xe8] sm:$0xff]
  %v164 = vld [vmem:[%s133 + $0xf0] sm:$0xff]
  %v165 = vld [vmem:[%s133 + $0xf8] sm:$0xff]
  %v166 = vld [vmem:[%s133 + $0x100] sm:$0xff]
  %v167 = vld [vmem:[%s133 + $0x108] sm:$0xff]
  %v168 = vld [vmem:[%s133 + $0x110] sm:$0xff]
  %v169 = vld [vmem:[%s133 + $0x118] sm:$0xff]
  %v170 = vld [vmem:[%s133 + $0x120] sm:$0xff]
  %v171 = vld [vmem:[%s133 + $0x128] sm:$0xff]
  %v172 = vld [vmem:[%s133 + $0x130] sm:$0xff]
  %v173 = vld [vmem:[%s133 + $0x138] sm:$0xff]
  %v174 = vld [vmem:[%s133 + $0x140] sm:$0xff]
  %v175 = vld [vmem:[%s133 + $0x148] sm:$0xff]
  %v176 = vld [vmem:[%s133 + $0x150] sm:$0xff]
  %v177 = vld [vmem:[%s133 + $0x158] sm:$0xff]
  %v178 = vld [vmem:[%s133 + $0x160] sm:$0xff]
  %v179 = vld [vmem:[%s133 + $0x168] sm:$0xff]
  %v180 = vld [vmem:[%s133 + $0x170] sm:$0xff]
  %v181 = vld [vmem:[%s133 + $0x178] sm:$0xff]
  %v182 = vld [vmem:[%s133 + $0x180] sm:$0xff]
  %v183 = vld [vmem:[%s133 + $0x188] sm:$0xff]
  %v184 = vld [vmem:[%s133 + $0x190] sm:$0xff]
  %v185 = vld [vmem:[%s133 + $0x198] sm:$0xff]
  %v186 = vld [vmem:[%s133 + $0x1a0] sm:$0xff]
  %v187 = vld [vmem:[%s133 + $0x1a8] sm:$0xff]
  %v188 = vld [vmem:[%s133 + $0x1b0] sm:$0xff]
  %v189 = vld [vmem:[%s133 + $0x1b8] sm:$0xff]
  %v190 = vld [vmem:[%s133 + $0x1c0] sm:$0xff]
  %v191 = vld [vmem:[%s133 + $0x1c8] sm:$0xff]
  %v192 = vld [vmem:[%s133 + $0x1d0] sm:$0xff]
  %v193 = vld [vmem:[%s133 + $0x1d8] sm:$0xff]
  %vm194 = vcmask 261120
  %v195 = vsel %vm194, %v114, 0
  %v197 = vsel %vm194, %v118, 0
  %v199 = vsel %vm194, %v124, 0
  %v201 = vsel %vm194, %v128, 0
  %203 = vmatprep.subr.mxu0 %v180
  %204 = vmatpush1.msra.mxu0 %v179
  %205 = vmatprep.subr.mxu0 %v177
  %206 = vmatpush1.msra.mxu0 %v176
  %207 = vmatprep.subr.mxu0 %v174
  %208 = vmatpush1.msra.mxu0 %v173
  %209 = vmatprep.subr.mxu0 %v171
  %210 = vmatpush1.msra.mxu0 %v170
  %211 = vmatprep.subr.mxu0 %v168
  %212 = vmatpush1.msra.mxu0 %v167
  %213 = vmatprep.subr.mxu0 %v165
  %214 = vmatpush1.msra.mxu0 %v164
  %215 = vmatprep.subr.mxu0 %v162
  %216 = vmatpush1.msra.mxu0 %v161
  %217 = vmatprep.subr.mxu0 %v159
  %218 = vmatpush1.msra.mxu0 %v158
  %219 = vmatprep.subr.mxu0 %v156
  %220 = vmatpush1.msra.mxu0 %v155
  %221 = vmatprep.subr.mxu0 %v153
  %222 = vmatpush1.msra.mxu0 %v152
  %223 = vmatprep.subr.mxu0 %v150
  %224 = vmatpush1.msra.mxu0 %v149
  %225 = vmatprep.subr.mxu0 %v147
  %226 = vmatpush1.msra.mxu0 %v146
  %227 = vmatprep.subr.mxu0 %v144
  %228 = vmatpush1.msra.mxu0 %v143
  %229 = vmatprep.subr.mxu0 %v141
  %230 = vmatpush1.msra.mxu0 %v140
  %231 = vmatprep.subr.mxu0 %v138
  %232 = vmatpush1.msra.mxu0 %v137
  %233 = vmatprep.subr.mxu0 %v135
  %234 = vmatpush1.msra.mxu0 %v134
  %235 = vmatprep.subr.mxu0 0.0
  %236 = vmatpush2.msra.mxu0 0.0
  %237 = vmatprep.subr.mxu0 0.0
  %238 = vmatpush2.msra.mxu0 0.0
  %239 = vmatprep.subr.mxu0 0.0
  %240 = vmatpush2.msra.mxu0 0.0
  %241 = vmatprep.subr.mxu0 0.0
  %242 = vmatpush2.msra.mxu0 0.0
  %243 = vmatprep.subr.mxu0 0.0
  %244 = vmatpush2.msra.mxu0 0.0
  %245 = vmatprep.subr.mxu0 0.0
  %246 = vmatpush2.msra.mxu0 0.0
  %247 = vmatprep.subr.mxu0 0.0
  %248 = vmatpush2.msra.mxu0 0.0
  %249 = vmatprep.subr.mxu0 0.0
  %250 = vmatpush2.msra.mxu0 0.0
  %251 = vmatprep.subr.mxu0 0.0
  %252 = vmatpush2.msra.mxu0 0.0
  %253 = vmatprep.subr.mxu0 0.0
  %254 = vmatpush2.msra.mxu0 0.0
  %255 = vmatprep.subr.mxu0 0.0
  %256 = vmatpush2.msra.mxu0 0.0
  %257 = vmatprep.subr.mxu0 0.0
  %258 = vmatpush2.msra.mxu0 0.0
  %259 = vmatprep.subr.mxu0 %v192
  %260 = vmatpush2.msra.mxu0 %v191
  %261 = vmatprep.subr.mxu0 %v189
  %262 = vmatpush2.msra.mxu0 %v188
  %263 = vmatprep.subr.mxu0 %v186
  %264 = vmatpush2.msra.mxu0 %v185
  %265 = vmatprep.subr.mxu0 %v183
  %266 = vmatpush2.msra.mxu0 %v182
  %267 = vmatprep.mubr.f32.mxu0 %v195
  %268 = vmatmul.mubr.f32.gmra.mxu0 %v111
  %v269 = vpop.f32.mrf.mxu0
  %v270 = vadd.f32 0.0, %v269
  %v271 = vpop.f32.mrf.mxu0
  %v272 = vadd.f32 0.0, %v271
  %273 = vmatprep.mubr.f32.mxu0 %v197
  %274 = vmatmul.mubr.f32.gmra.mxu0 %v116
  %v275 = vpop.f32.mrf.mxu0
  %v276 = vadd.f32 0.0, %v275
  %v277 = vpop.f32.mrf.mxu0
  %v278 = vadd.f32 0.0, %v277
  %279 = vmatprep.mubr.f32.mxu0 %v199
  %280 = vmatmul.mubr.f32.gmra.mxu0 %v121
  %v281 = vpop.f32.mrf.mxu0
  %v282 = vadd.f32 0.0, %v281
  %v283 = vpop.f32.mrf.mxu0
  %v284 = vadd.f32 0.0, %v283
  %285 = vmatprep.mubr.f32.mxu0 %v201
  %286 = vmatmul.mubr.f32.gmra.mxu0 %v126
  %v287 = vpop.f32.mrf.mxu0
  %v288 = vadd.f32 0.0, %v287
  %v289 = vpop.f32.mrf.mxu0
  %v290 = vadd.f32 0.0, %v289
  %291 = vdwg.mxu0
  %292 = vmatprep.subr.mxu0 0.0
  %293 = vmatpush1.msra.mxu0 %v181
  %294 = vmatprep.subr.mxu0 0.0
  %295 = vmatpush1.msra.mxu0 %v178
  %296 = vmatprep.subr.mxu0 0.0
  %297 = vmatpush1.msra.mxu0 %v175
  %298 = vmatprep.subr.mxu0 0.0
  %299 = vmatpush1.msra.mxu0 %v172
  %300 = vmatprep.subr.mxu0 0.0
  %301 = vmatpush1.msra.mxu0 %v169
  %302 = vmatprep.subr.mxu0 0.0
  %303 = vmatpush1.msra.mxu0 %v166
  %304 = vmatprep.subr.mxu0 0.0
  %305 = vmatpush1.msra.mxu0 %v163
  %306 = vmatprep.subr.mxu0 0.0
  %307 = vmatpush1.msra.mxu0 %v160
  %308 = vmatprep.subr.mxu0 0.0
  %309 = vmatpush1.msra.mxu0 %v157
  %310 = vmatprep.subr.mxu0 0.0
  %311 = vmatpush1.msra.mxu0 %v154
  %312 = vmatprep.subr.mxu0 0.0
  %313 = vmatpush1.msra.mxu0 %v151
  %314 = vmatprep.subr.mxu0 0.0
  %315 = vmatpush1.msra.mxu0 %v148
  %316 = vmatprep.subr.mxu0 0.0
  %317 = vmatpush1.msra.mxu0 %v145
  %318 = vmatprep.subr.mxu0 0.0
  %319 = vmatpush1.msra.mxu0 %v142
  %320 = vmatprep.subr.mxu0 0.0
  %321 = vmatpush1.msra.mxu0 %v139
  %322 = vmatprep.subr.mxu0 0.0
  %323 = vmatpush1.msra.mxu0 %v136
  %324 = vmatprep.subr.mxu0 0.0
  %325 = vmatpush2.msra.mxu0 0.0
  %326 = vmatprep.subr.mxu0 0.0
  %327 = vmatpush2.msra.mxu0 0.0
  %328 = vmatprep.subr.mxu0 0.0
  %329 = vmatpush2.msra.mxu0 0.0
  %330 = vmatprep.subr.mxu0 0.0
  %331 = vmatpush2.msra.mxu0 0.0
  %332 = vmatprep.subr.mxu0 0.0
  %333 = vmatpush2.msra.mxu0 0.0
  %334 = vmatprep.subr.mxu0 0.0
  %335 = vmatpush2.msra.mxu0 0.0
  %336 = vmatprep.subr.mxu0 0.0
  %337 = vmatpush2.msra.mxu0 0.0
  %338 = vmatprep.subr.mxu0 0.0
  %339 = vmatpush2.msra.mxu0 0.0
  %340 = vmatprep.subr.mxu0 0.0
  %341 = vmatpush2.msra.mxu0 0.0
  %342 = vmatprep.subr.mxu0 0.0
  %343 = vmatpush2.msra.mxu0 0.0
  %344 = vmatprep.subr.mxu0 0.0
  %345 = vmatpush2.msra.mxu0 0.0
  %346 = vmatprep.subr.mxu0 0.0
  %347 = vmatpush2.msra.mxu0 0.0
  %348 = vmatprep.subr.mxu0 0.0
  %349 = vmatpush2.msra.mxu0 %v193
  %350 = vmatprep.subr.mxu0 0.0
  %351 = vmatpush2.msra.mxu0 %v190
  %352 = vmatprep.subr.mxu0 0.0
  %353 = vmatpush2.msra.mxu0 %v187
  %354 = vmatprep.subr.mxu0 0.0
  %355 = vmatpush2.msra.mxu0 %v184
  %356 = vmatprep.mubr.f32.mxu0 %v195
  %357 = vmatmul.mubr.f32.gmra.mxu0 %v111
  %v358 = vpop.f32.mrf.mxu0
  %v359 = vadd.f32 0.0, %v358
  %v360 = vpop.f32.mrf.mxu0
  %361 = vmatprep.mubr.f32.mxu0 %v197
  %362 = vmatmul.mubr.f32.gmra.mxu0 %v116
  %v363 = vpop.f32.mrf.mxu0
  %v364 = vadd.f32 0.0, %v363
  %v365 = vpop.f32.mrf.mxu0
  %366 = vmatprep.mubr.f32.mxu0 %v199
  %367 = vmatmul.mubr.f32.gmra.mxu0 %v121
  %v368 = vpop.f32.mrf.mxu0
  %v369 = vadd.f32 0.0, %v368
  %v370 = vpop.f32.mrf.mxu0
  %371 = vmatprep.mubr.f32.mxu0 %v201
  %372 = vmatmul.mubr.f32.gmra.mxu0 %v126
  %v373 = vpop.f32.mrf.mxu0
  %v374 = vadd.f32 0.0, %v373
  %v375 = vpop.f32.mrf.mxu0
  %376 = vdwg.mxu0
  %v378 = vsel %vm194, %v21, 0
  %v380 = vsel %vm194, %v23, 0
  %v383 = vsel %vm194, %v25, 0
  %v385 = vsel %vm194, %v27, 0
  %387 = vmatprep.subr.mxu0 %v74
  %388 = vmatpush1.msra.mxu0 %v73
  %389 = vmatprep.subr.mxu0 %v71
  %390 = vmatpush1.msra.mxu0 %v70
  %391 = vmatprep.subr.mxu0 %v68
  %392 = vmatpush1.msra.mxu0 %v67
  %393 = vmatprep.subr.mxu0 %v65
  %394 = vmatpush1.msra.mxu0 %v64
  %395 = vmatprep.subr.mxu0 %v62
  %396 = vmatpush1.msra.mxu0 %v61
  %397 = vmatprep.subr.mxu0 %v59
  %398 = vmatpush1.msra.mxu0 %v58
  %399 = vmatprep.subr.mxu0 %v56
  %400 = vmatpush1.msra.mxu0 %v55
  %401 = vmatprep.subr.mxu0 %v53
  %402 = vmatpush1.msra.mxu0 %v52
  %403 = vmatprep.subr.mxu0 %v50
  %404 = vmatpush1.msra.mxu0 %v49
  %405 = vmatprep.subr.mxu0 %v47
  %406 = vmatpush1.msra.mxu0 %v46
  %407 = vmatprep.subr.mxu0 %v44
  %408 = vmatpush1.msra.mxu0 %v43
  %409 = vmatprep.subr.mxu0 %v41
  %410 = vmatpush1.msra.mxu0 %v40
  %411 = vmatprep.subr.mxu0 %v38
  %412 = vmatpush1.msra.mxu0 %v37
  %413 = vmatprep.subr.mxu0 %v35
  %414 = vmatpush1.msra.mxu0 %v34
  %415 = vmatprep.subr.mxu0 %v32
  %416 = vmatpush1.msra.mxu0 %v31
  %417 = vmatprep.subr.mxu0 %v29
  %418 = vmatpush1.msra.mxu0 %v28
  %419 = vmatprep.subr.mxu0 0.0
  %420 = vmatpush2.msra.mxu0 0.0
  %421 = vmatprep.subr.mxu0 0.0
  %422 = vmatpush2.msra.mxu0 0.0
  %423 = vmatprep.subr.mxu0 0.0
  %424 = vmatpush2.msra.mxu0 0.0
  %425 = vmatprep.subr.mxu0 0.0
  %426 = vmatpush2.msra.mxu0 0.0
  %427 = vmatprep.subr.mxu0 0.0
  %428 = vmatpush2.msra.mxu0 0.0
  %429 = vmatprep.subr.mxu0 0.0
  %430 = vmatpush2.msra.mxu0 0.0
  %431 = vmatprep.subr.mxu0 0.0
  %432 = vmatpush2.msra.mxu0 0.0
  %433 = vmatprep.subr.mxu0 0.0
  %434 = vmatpush2.msra.mxu0 0.0
  %435 = vmatprep.subr.mxu0 0.0
  %436 = vmatpush2.msra.mxu0 0.0
  %437 = vmatprep.subr.mxu0 0.0
  %438 = vmatpush2.msra.mxu0 0.0
  %439 = vmatprep.subr.mxu0 0.0
  %440 = vmatpush2.msra.mxu0 0.0
  %441 = vmatprep.subr.mxu0 0.0
  %442 = vmatpush2.msra.mxu0 0.0
  %443 = vmatprep.subr.mxu0 %v86
  %444 = vmatpush2.msra.mxu0 %v85
  %445 = vmatprep.subr.mxu0 %v83
  %446 = vmatpush2.msra.mxu0 %v82
  %447 = vmatprep.subr.mxu0 %v80
  %448 = vmatpush2.msra.mxu0 %v79
  %449 = vmatprep.subr.mxu0 %v77
  %450 = vmatpush2.msra.mxu0 %v76
  %451 = vmatprep.mubr.f32.mxu0 %v378
  %452 = vmatmul.mubr.f32.gmra.mxu0 %v20
  %v453 = vpop.f32.mrf.mxu0
  %v454 = vadd.f32 %v270, %v453
  %v455 = vpop.f32.mrf.mxu0
  %v456 = vadd.f32 %v272, %v455
  %457 = vmatprep.mubr.f32.mxu0 %v380
  %458 = vmatmul.mubr.f32.gmra.mxu0 %v22
  %v459 = vpop.f32.mrf.mxu0
  %v460 = vadd.f32 %v276, %v459
  %v461 = vpop.f32.mrf.mxu0
  %v462 = vadd.f32 %v278, %v461
  %463 = vmatprep.mubr.f32.mxu0 %v383
  %464 = vmatmul.mubr.f32.gmra.mxu0 %v24
  %v465 = vpop.f32.mrf.mxu0
  %v466 = vadd.f32 %v282, %v465
  %v467 = vpop.f32.mrf.mxu0
  %v468 = vadd.f32 %v284, %v467
  %469 = vmatprep.mubr.f32.mxu0 %v385
  %470 = vmatmul.mubr.f32.gmra.mxu0 %v26
  %v471 = vpop.f32.mrf.mxu0
  %v472 = vadd.f32 %v288, %v471
  %v473 = vpop.f32.mrf.mxu0
  %v474 = vadd.f32 %v290, %v473
  %475 = vdwg.mxu0
  %476 = vmatprep.subr.mxu0 0.0
  %477 = vmatpush1.msra.mxu0 %v75
  %478 = vmatprep.subr.mxu0 0.0
  %479 = vmatpush1.msra.mxu0 %v72
  %480 = vmatprep.subr.mxu0 0.0
  %481 = vmatpush1.msra.mxu0 %v69
  %482 = vmatprep.subr.mxu0 0.0
  %483 = vmatpush1.msra.mxu0 %v66
  %484 = vmatprep.subr.mxu0 0.0
  %485 = vmatpush1.msra.mxu0 %v63
  %486 = vmatprep.subr.mxu0 0.0
  %487 = vmatpush1.msra.mxu0 %v60
  %488 = vmatprep.subr.mxu0 0.0
  %489 = vmatpush1.msra.mxu0 %v57
  %490 = vmatprep.subr.mxu0 0.0
  %491 = vmatpush1.msra.mxu0 %v54
  %492 = vmatprep.subr.mxu0 0.0
  %493 = vmatpush1.msra.mxu0 %v51
  %494 = vmatprep.subr.mxu0 0.0
  %495 = vmatpush1.msra.mxu0 %v48
  %496 = vmatprep.subr.mxu0 0.0
  %497 = vmatpush1.msra.mxu0 %v45
  %498 = vmatprep.subr.mxu0 0.0
  %499 = vmatpush1.msra.mxu0 %v42
  %500 = vmatprep.subr.mxu0 0.0
  %501 = vmatpush1.msra.mxu0 %v39
  %502 = vmatprep.subr.mxu0 0.0
  %503 = vmatpush1.msra.mxu0 %v36
  %504 = vmatprep.subr.mxu0 0.0
  %505 = vmatpush1.msra.mxu0 %v33
  %506 = vmatprep.subr.mxu0 0.0
  %507 = vmatpush1.msra.mxu0 %v30
  %508 = vmatprep.subr.mxu0 0.0
  %509 = vmatpush2.msra.mxu0 0.0
  %510 = vmatprep.subr.mxu0 0.0
  %511 = vmatpush2.msra.mxu0 0.0
  %512 = vmatprep.subr.mxu0 0.0
  %513 = vmatpush2.msra.mxu0 0.0
  %514 = vmatprep.subr.mxu0 0.0
  %515 = vmatpush2.msra.mxu0 0.0
  %516 = vmatprep.subr.mxu0 0.0
  %517 = vmatpush2.msra.mxu0 0.0
  %518 = vmatprep.subr.mxu0 0.0
  %519 = vmatpush2.msra.mxu0 0.0
  %520 = vmatprep.subr.mxu0 0.0
  %521 = vmatpush2.msra.mxu0 0.0
  %522 = vmatprep.subr.mxu0 0.0
  %523 = vmatpush2.msra.mxu0 0.0
  %524 = vmatprep.subr.mxu0 0.0
  %525 = vmatpush2.msra.mxu0 0.0
  %526 = vmatprep.subr.mxu0 0.0
  %527 = vmatpush2.msra.mxu0 0.0
  %528 = vmatprep.subr.mxu0 0.0
  %529 = vmatpush2.msra.mxu0 0.0
  %530 = vmatprep.subr.mxu0 0.0
  %531 = vmatpush2.msra.mxu0 0.0
  %532 = vmatprep.subr.mxu0 0.0
  %533 = vmatpush2.msra.mxu0 %v87
  %534 = vmatprep.subr.mxu0 0.0
  %535 = vmatpush2.msra.mxu0 %v84
  %536 = vmatprep.subr.mxu0 0.0
  %537 = vmatpush2.msra.mxu0 %v81
  %538 = vmatprep.subr.mxu0 0.0
  %539 = vmatpush2.msra.mxu0 %v78
  %540 = vmatprep.mubr.f32.mxu0 %v378
  %541 = vmatmul.mubr.f32.gmra.mxu0 %v20
  %v542 = vpop.f32.mrf.mxu0
  %v543 = vadd.f32 %v359, %v542
  %v544 = vpop.f32.mrf.mxu0
  %545 = vmatprep.mubr.f32.mxu0 %v380
  %546 = vmatmul.mubr.f32.gmra.mxu0 %v22
  %v547 = vpop.f32.mrf.mxu0
  %v548 = vadd.f32 %v364, %v547
  %v549 = vpop.f32.mrf.mxu0
  %550 = vmatprep.mubr.f32.mxu0 %v383
  %551 = vmatmul.mubr.f32.gmra.mxu0 %v24
  %v552 = vpop.f32.mrf.mxu0
  %v553 = vadd.f32 %v369, %v552
  %v554 = vpop.f32.mrf.mxu0
  %555 = vmatprep.mubr.f32.mxu0 %v385
  %556 = vmatmul.mubr.f32.gmra.mxu0 %v26
  %v557 = vpop.f32.mrf.mxu0
  %v558 = vadd.f32 %v374, %v557
  %v559 = vpop.f32.mrf.mxu0
  %560 = vdwg.mxu0
  %v561 = vld [vmem:[%s0] sm:$0xfc]
  %v562 = vld [vmem:[%s0 + $0x8] sm:$0xfc]
  %v563 = vld [vmem:[%s0 + $0x20] sm:$0x3]
  %v564 = vld [vmem:[%s0 + $0x28] sm:$0x3]
  %v565 = vld [vmem:[%s0 + $0x30] sm:$0xfc]
  %v566 = vld [vmem:[%s0 + $0x38] sm:$0xfc]
  %v567 = vld [vmem:[%s0 + $0x50] sm:$0x3]
  %v568 = vld [vmem:[%s0 + $0x58] sm:$0x3]
  %vm577 = vcmask 1045504
  %v578 = vrot.slane %v561, 2
  %v579 = vrot.slane %v22, 2
  %v580 = vsel %vm577, %v578, %v579
  %v581 = vrot.slane %v562, 2
  %v582 = vrot.slane %v23, 2
  %v583 = vsel %vm577, %v581, %v582
  %v584 = vrot.slane %v563, 2
  %v585 = vsel %vm577, %v579, %v584
  %v586 = vrot.slane %v564, 2
  %v587 = vsel %vm577, %v582, %v586
  %v588 = vrot.slane %v565, 2
  %v589 = vrot.slane %v26, 2
  %v590 = vsel %vm577, %v588, %v589
  %v591 = vrot.slane %v566, 2
  %v592 = vrot.slane %v27, 2
  %v593 = vsel %vm577, %v591, %v592
  %v594 = vrot.slane %v567, 2
  %v595 = vsel %vm577, %v589, %v594
  %v596 = vrot.slane %v568, 2
  %v597 = vsel %vm577, %v592, %v596
  %s602 = scalar_lea.vmem %s1, 960
  %v603 = vld [vmem:[%s602] sm:$0xff]
  %v604 = vld [vmem:[%s602 + $0x8] sm:$0xff]
  %v605 = vld [vmem:[%s602 + $0x10] sm:$0xff]
  %v606 = vld [vmem:[%s602 + $0x18] sm:$0xff]
  %v607 = vld [vmem:[%s602 + $0x20] sm:$0xff]
  %v608 = vld [vmem:[%s602 + $0x28] sm:$0xff]
  %v609 = vld [vmem:[%s602 + $0x30] sm:$0xff]
  %v610 = vld [vmem:[%s602 + $0x38] sm:$0xff]
  %v611 = vld [vmem:[%s602 + $0x40] sm:$0xff]
  %v612 = vld [vmem:[%s602 + $0x48] sm:$0xff]
  %v613 = vld [vmem:[%s602 + $0x50] sm:$0xff]
  %v614 = vld [vmem:[%s602 + $0x58] sm:$0xff]
  %v615 = vld [vmem:[%s602 + $0x60] sm:$0xff]
  %v616 = vld [vmem:[%s602 + $0x68] sm:$0xff]
  %v617 = vld [vmem:[%s602 + $0x70] sm:$0xff]
  %v618 = vld [vmem:[%s602 + $0x78] sm:$0xff]
  %v619 = vld [vmem:[%s602 + $0x80] sm:$0xff]
  %v620 = vld [vmem:[%s602 + $0x88] sm:$0xff]
  %v621 = vld [vmem:[%s602 + $0x90] sm:$0xff]
  %v622 = vld [vmem:[%s602 + $0x98] sm:$0xff]
  %v623 = vld [vmem:[%s602 + $0xa0] sm:$0xff]
  %v624 = vld [vmem:[%s602 + $0xa8] sm:$0xff]
  %v625 = vld [vmem:[%s602 + $0xb0] sm:$0xff]
  %v626 = vld [vmem:[%s602 + $0xb8] sm:$0xff]
  %v627 = vld [vmem:[%s602 + $0xc0] sm:$0xff]
  %v628 = vld [vmem:[%s602 + $0xc8] sm:$0xff]
  %v629 = vld [vmem:[%s602 + $0xd0] sm:$0xff]
  %v630 = vld [vmem:[%s602 + $0xd8] sm:$0xff]
  %v631 = vld [vmem:[%s602 + $0xe0] sm:$0xff]
  %v632 = vld [vmem:[%s602 + $0xe8] sm:$0xff]
  %v633 = vld [vmem:[%s602 + $0xf0] sm:$0xff]
  %v634 = vld [vmem:[%s602 + $0xf8] sm:$0xff]
  %v635 = vld [vmem:[%s602 + $0x100] sm:$0xff]
  %v636 = vld [vmem:[%s602 + $0x108] sm:$0xff]
  %v637 = vld [vmem:[%s602 + $0x110] sm:$0xff]
  %v638 = vld [vmem:[%s602 + $0x118] sm:$0xff]
  %v639 = vld [vmem:[%s602 + $0x120] sm:$0xff]
  %v640 = vld [vmem:[%s602 + $0x128] sm:$0xff]
  %v641 = vld [vmem:[%s602 + $0x130] sm:$0xff]
  %v642 = vld [vmem:[%s602 + $0x138] sm:$0xff]
  %v643 = vld [vmem:[%s602 + $0x140] sm:$0xff]
  %v644 = vld [vmem:[%s602 + $0x148] sm:$0xff]
  %v645 = vld [vmem:[%s602 + $0x150] sm:$0xff]
  %v646 = vld [vmem:[%s602 + $0x158] sm:$0xff]
  %v647 = vld [vmem:[%s602 + $0x160] sm:$0xff]
  %v648 = vld [vmem:[%s602 + $0x168] sm:$0xff]
  %v649 = vld [vmem:[%s602 + $0x170] sm:$0xff]
  %v650 = vld [vmem:[%s602 + $0x178] sm:$0xff]
  %v651 = vld [vmem:[%s602 + $0x180] sm:$0xff]
  %v652 = vld [vmem:[%s602 + $0x188] sm:$0xff]
  %v653 = vld [vmem:[%s602 + $0x190] sm:$0xff]
  %v654 = vld [vmem:[%s602 + $0x198] sm:$0xff]
  %v655 = vld [vmem:[%s602 + $0x1a0] sm:$0xff]
  %v656 = vld [vmem:[%s602 + $0x1a8] sm:$0xff]
  %v657 = vld [vmem:[%s602 + $0x1b0] sm:$0xff]
  %v658 = vld [vmem:[%s602 + $0x1b8] sm:$0xff]
  %v659 = vld [vmem:[%s602 + $0x1c0] sm:$0xff]
  %v660 = vld [vmem:[%s602 + $0x1c8] sm:$0xff]
  %v661 = vld [vmem:[%s602 + $0x1d0] sm:$0xff]
  %v662 = vld [vmem:[%s602 + $0x1d8] sm:$0xff]
  %v663 = vsel %vm194, %v583, 0
  %v665 = vsel %vm194, %v587, 0
  %v667 = vsel %vm194, %v593, 0
  %v669 = vsel %vm194, %v597, 0
  %671 = vmatprep.subr.mxu0 %v649
  %672 = vmatpush1.msra.mxu0 %v648
  %673 = vmatprep.subr.mxu0 %v646
  %674 = vmatpush1.msra.mxu0 %v645
  %675 = vmatprep.subr.mxu0 %v643
  %676 = vmatpush1.msra.mxu0 %v642
  %677 = vmatprep.subr.mxu0 %v640
  %678 = vmatpush1.msra.mxu0 %v639
  %679 = vmatprep.subr.mxu0 %v637
  %680 = vmatpush1.msra.mxu0 %v636
  %681 = vmatprep.subr.mxu0 %v634
  %682 = vmatpush1.msra.mxu0 %v633
  %683 = vmatprep.subr.mxu0 %v631
  %684 = vmatpush1.msra.mxu0 %v630
  %685 = vmatprep.subr.mxu0 %v628
  %686 = vmatpush1.msra.mxu0 %v627
  %687 = vmatprep.subr.mxu0 %v625
  %688 = vmatpush1.msra.mxu0 %v624
  %689 = vmatprep.subr.mxu0 %v622
  %690 = vmatpush1.msra.mxu0 %v621
  %691 = vmatprep.subr.mxu0 %v619
  %692 = vmatpush1.msra.mxu0 %v618
  %693 = vmatprep.subr.mxu0 %v616
  %694 = vmatpush1.msra.mxu0 %v615
  %695 = vmatprep.subr.mxu0 %v613
  %696 = vmatpush1.msra.mxu0 %v612
  %697 = vmatprep.subr.mxu0 %v610
  %698 = vmatpush1.msra.mxu0 %v609
  %699 = vmatprep.subr.mxu0 %v607
  %700 = vmatpush1.msra.mxu0 %v606
  %701 = vmatprep.subr.mxu0 %v604
  %702 = vmatpush1.msra.mxu0 %v603
  %703 = vmatprep.subr.mxu0 0.0
  %704 = vmatpush2.msra.mxu0 0.0
  %705 = vmatprep.subr.mxu0 0.0
  %706 = vmatpush2.msra.mxu0 0.0
  %707 = vmatprep.subr.mxu0 0.0
  %708 = vmatpush2.msra.mxu0 0.0
  %709 = vmatprep.subr.mxu0 0.0
  %710 = vmatpush2.msra.mxu0 0.0
  %711 = vmatprep.subr.mxu0 0.0
  %712 = vmatpush2.msra.mxu0 0.0
  %713 = vmatprep.subr.mxu0 0.0
  %714 = vmatpush2.msra.mxu0 0.0
  %715 = vmatprep.subr.mxu0 0.0
  %716 = vmatpush2.msra.mxu0 0.0
  %717 = vmatprep.subr.mxu0 0.0
  %718 = vmatpush2.msra.mxu0 0.0
  %719 = vmatprep.subr.mxu0 0.0
  %720 = vmatpush2.msra.mxu0 0.0
  %721 = vmatprep.subr.mxu0 0.0
  %722 = vmatpush2.msra.mxu0 0.0
  %723 = vmatprep.subr.mxu0 0.0
  %724 = vmatpush2.msra.mxu0 0.0
  %725 = vmatprep.subr.mxu0 0.0
  %726 = vmatpush2.msra.mxu0 0.0
  %727 = vmatprep.subr.mxu0 %v661
  %728 = vmatpush2.msra.mxu0 %v660
  %729 = vmatprep.subr.mxu0 %v658
  %730 = vmatpush2.msra.mxu0 %v657
  %731 = vmatprep.subr.mxu0 %v655
  %732 = vmatpush2.msra.mxu0 %v654
  %733 = vmatprep.subr.mxu0 %v652
  %734 = vmatpush2.msra.mxu0 %v651
  %735 = vmatprep.mubr.f32.mxu0 %v663
  %736 = vmatmul.mubr.f32.gmra.mxu0 %v580
  %v737 = vpop.f32.mrf.mxu0
  %v738 = vadd.f32 0.0, %v737
  %v739 = vpop.f32.mrf.mxu0
  %v740 = vadd.f32 0.0, %v739
  %741 = vmatprep.mubr.f32.mxu0 %v665
  %742 = vmatmul.mubr.f32.gmra.mxu0 %v585
  %v743 = vpop.f32.mrf.mxu0
  %v744 = vadd.f32 0.0, %v743
  %v745 = vpop.f32.mrf.mxu0
  %v746 = vadd.f32 0.0, %v745
  %747 = vmatprep.mubr.f32.mxu0 %v667
  %748 = vmatmul.mubr.f32.gmra.mxu0 %v590
  %v749 = vpop.f32.mrf.mxu0
  %v750 = vadd.f32 0.0, %v749
  %v751 = vpop.f32.mrf.mxu0
  %v752 = vadd.f32 0.0, %v751
  %753 = vmatprep.mubr.f32.mxu0 %v669
  %754 = vmatmul.mubr.f32.gmra.mxu0 %v595
  %v755 = vpop.f32.mrf.mxu0
  %v756 = vadd.f32 0.0, %v755
  %v757 = vpop.f32.mrf.mxu0
  %v758 = vadd.f32 0.0, %v757
  %759 = vdwg.mxu0
  %760 = vmatprep.subr.mxu0 0.0
  %761 = vmatpush1.msra.mxu0 %v650
  %762 = vmatprep.subr.mxu0 0.0
  %763 = vmatpush1.msra.mxu0 %v647
  %764 = vmatprep.subr.mxu0 0.0
  %765 = vmatpush1.msra.mxu0 %v644
  %766 = vmatprep.subr.mxu0 0.0
  %767 = vmatpush1.msra.mxu0 %v641
  %768 = vmatprep.subr.mxu0 0.0
  %769 = vmatpush1.msra.mxu0 %v638
  %770 = vmatprep.subr.mxu0 0.0
  %771 = vmatpush1.msra.mxu0 %v635
  %772 = vmatprep.subr.mxu0 0.0
  %773 = vmatpush1.msra.mxu0 %v632
  %774 = vmatprep.subr.mxu0 0.0
  %775 = vmatpush1.msra.mxu0 %v629
  %776 = vmatprep.subr.mxu0 0.0
  %777 = vmatpush1.msra.mxu0 %v626
  %778 = vmatprep.subr.mxu0 0.0
  %779 = vmatpush1.msra.mxu0 %v623
  %780 = vmatprep.subr.mxu0 0.0
  %781 = vmatpush1.msra.mxu0 %v620
  %782 = vmatprep.subr.mxu0 0.0
  %783 = vmatpush1.msra.mxu0 %v617
  %784 = vmatprep.subr.mxu0 0.0
  %785 = vmatpush1.msra.mxu0 %v614
  %786 = vmatprep.subr.mxu0 0.0
  %787 = vmatpush1.msra.mxu0 %v611
  %788 = vmatprep.subr.mxu0 0.0
  %789 = vmatpush1.msra.mxu0 %v608
  %790 = vmatprep.subr.mxu0 0.0
  %791 = vmatpush1.msra.mxu0 %v605
  %792 = vmatprep.subr.mxu0 0.0
  %793 = vmatpush2.msra.mxu0 0.0
  %794 = vmatprep.subr.mxu0 0.0
  %795 = vmatpush2.msra.mxu0 0.0
  %796 = vmatprep.subr.mxu0 0.0
  %797 = vmatpush2.msra.mxu0 0.0
  %798 = vmatprep.subr.mxu0 0.0
  %799 = vmatpush2.msra.mxu0 0.0
  %800 = vmatprep.subr.mxu0 0.0
  %801 = vmatpush2.msra.mxu0 0.0
  %802 = vmatprep.subr.mxu0 0.0
  %803 = vmatpush2.msra.mxu0 0.0
  %804 = vmatprep.subr.mxu0 0.0
  %805 = vmatpush2.msra.mxu0 0.0
  %806 = vmatprep.subr.mxu0 0.0
  %807 = vmatpush2.msra.mxu0 0.0
  %808 = vmatprep.subr.mxu0 0.0
  %809 = vmatpush2.msra.mxu0 0.0
  %810 = vmatprep.subr.mxu0 0.0
  %811 = vmatpush2.msra.mxu0 0.0
  %812 = vmatprep.subr.mxu0 0.0
  %813 = vmatpush2.msra.mxu0 0.0
  %814 = vmatprep.subr.mxu0 0.0
  %815 = vmatpush2.msra.mxu0 0.0
  %816 = vmatprep.subr.mxu0 0.0
  %817 = vmatpush2.msra.mxu0 %v662
  %818 = vmatprep.subr.mxu0 0.0
  %819 = vmatpush2.msra.mxu0 %v659
  %820 = vmatprep.subr.mxu0 0.0
  %821 = vmatpush2.msra.mxu0 %v656
  %822 = vmatprep.subr.mxu0 0.0
  %823 = vmatpush2.msra.mxu0 %v653
  %824 = vmatprep.mubr.f32.mxu0 %v663
  %825 = vmatmul.mubr.f32.gmra.mxu0 %v580
  %v826 = vpop.f32.mrf.mxu0
  %v827 = vadd.f32 0.0, %v826
  %v828 = vpop.f32.mrf.mxu0
  %829 = vmatprep.mubr.f32.mxu0 %v665
  %830 = vmatmul.mubr.f32.gmra.mxu0 %v585
  %v831 = vpop.f32.mrf.mxu0
  %v832 = vadd.f32 0.0, %v831
  %v833 = vpop.f32.mrf.mxu0
  %834 = vmatprep.mubr.f32.mxu0 %v667
  %835 = vmatmul.mubr.f32.gmra.mxu0 %v590
  %v836 = vpop.f32.mrf.mxu0
  %v837 = vadd.f32 0.0, %v836
  %v838 = vpop.f32.mrf.mxu0
  %839 = vmatprep.mubr.f32.mxu0 %v669
  %840 = vmatmul.mubr.f32.gmra.mxu0 %v595
  %v841 = vpop.f32.mrf.mxu0
  %v842 = vadd.f32 0.0, %v841
  %v843 = vpop.f32.mrf.mxu0
  %844 = vdwg.mxu0
  %v845 = vadd.f32 %v454, %v738
  %v846 = vadd.f32 %v456, %v740
  %v847 = vadd.f32 %v543, %v827
  %v848 = vadd.f32 %v460, %v744
  %v849 = vadd.f32 %v462, %v746
  %v850 = vadd.f32 %v548, %v832
  %v851 = vadd.f32 %v466, %v750
  %v852 = vadd.f32 %v468, %v752
  %v853 = vadd.f32 %v553, %v837
  %v854 = vadd.f32 %v472, %v756
  %v855 = vadd.f32 %v474, %v758
  %v856 = vadd.f32 %v558, %v842
  %v857 = vld [vmem:[%s0] sm:$0xf8]
  %v858 = vld [vmem:[%s0 + $0x8] sm:$0xf8]
  %v859 = vld [vmem:[%s0 + $0x20] sm:$0x7]
  %v860 = vld [vmem:[%s0 + $0x28] sm:$0x7]
  %v861 = vld [vmem:[%s0 + $0x30] sm:$0xf8]
  %v862 = vld [vmem:[%s0 + $0x38] sm:$0xf8]
  %v863 = vld [vmem:[%s0 + $0x50] sm:$0x7]
  %v864 = vld [vmem:[%s0 + $0x58] sm:$0x7]
  %vm873 = vcmask 1044480
  %v874 = vrot.slane %v857, 3
  %v875 = vrot.slane %v22, 3
  %v876 = vsel %vm873, %v874, %v875
  %v877 = vrot.slane %v858, 3
  %v878 = vrot.slane %v23, 3
  %v879 = vsel %vm873, %v877, %v878
  %v880 = vrot.slane %v859, 3
  %v881 = vsel %vm873, %v875, %v880
  %v882 = vrot.slane %v860, 3
  %v883 = vsel %vm873, %v878, %v882
  %v884 = vrot.slane %v861, 3
  %v885 = vrot.slane %v26, 3
  %v886 = vsel %vm873, %v884, %v885
  %v887 = vrot.slane %v862, 3
  %v888 = vrot.slane %v27, 3
  %v889 = vsel %vm873, %v887, %v888
  %v890 = vrot.slane %v863, 3
  %v891 = vsel %vm873, %v885, %v890
  %v892 = vrot.slane %v864, 3
  %v893 = vsel %vm873, %v888, %v892
  %s898 = scalar_lea.vmem %s1, 1440
  %v899 = vld [vmem:[%s898] sm:$0xff]
  %v900 = vld [vmem:[%s898 + $0x8] sm:$0xff]
  %v901 = vld [vmem:[%s898 + $0x10] sm:$0xff]
  %v902 = vld [vmem:[%s898 + $0x18] sm:$0xff]
  %v903 = vld [vmem:[%s898 + $0x20] sm:$0xff]
  %v904 = vld [vmem:[%s898 + $0x28] sm:$0xff]
  %v905 = vld [vmem:[%s898 + $0x30] sm:$0xff]
  %v906 = vld [vmem:[%s898 + $0x38] sm:$0xff]
  %v907 = vld [vmem:[%s898 + $0x40] sm:$0xff]
  %v908 = vld [vmem:[%s898 + $0x48] sm:$0xff]
  %v909 = vld [vmem:[%s898 + $0x50] sm:$0xff]
  %v910 = vld [vmem:[%s898 + $0x58] sm:$0xff]
  %v911 = vld [vmem:[%s898 + $0x60] sm:$0xff]
  %v912 = vld [vmem:[%s898 + $0x68] sm:$0xff]
  %v913 = vld [vmem:[%s898 + $0x70] sm:$0xff]
  %v914 = vld [vmem:[%s898 + $0x78] sm:$0xff]
  %v915 = vld [vmem:[%s898 + $0x80] sm:$0xff]
  %v916 = vld [vmem:[%s898 + $0x88] sm:$0xff]
  %v917 = vld [vmem:[%s898 + $0x90] sm:$0xff]
  %v918 = vld [vmem:[%s898 + $0x98] sm:$0xff]
  %v919 = vld [vmem:[%s898 + $0xa0] sm:$0xff]
  %v920 = vld [vmem:[%s898 + $0xa8] sm:$0xff]
  %v921 = vld [vmem:[%s898 + $0xb0] sm:$0xff]
  %v922 = vld [vmem:[%s898 + $0xb8] sm:$0xff]
  %v923 = vld [vmem:[%s898 + $0xc0] sm:$0xff]
  %v924 = vld [vmem:[%s898 + $0xc8] sm:$0xff]
  %v925 = vld [vmem:[%s898 + $0xd0] sm:$0xff]
  %v926 = vld [vmem:[%s898 + $0xd8] sm:$0xff]
  %v927 = vld [vmem:[%s898 + $0xe0] sm:$0xff]
  %v928 = vld [vmem:[%s898 + $0xe8] sm:$0xff]
  %v929 = vld [vmem:[%s898 + $0xf0] sm:$0xff]
  %v930 = vld [vmem:[%s898 + $0xf8] sm:$0xff]
  %v931 = vld [vmem:[%s898 + $0x100] sm:$0xff]
  %v932 = vld [vmem:[%s898 + $0x108] sm:$0xff]
  %v933 = vld [vmem:[%s898 + $0x110] sm:$0xff]
  %v934 = vld [vmem:[%s898 + $0x118] sm:$0xff]
  %v935 = vld [vmem:[%s898 + $0x120] sm:$0xff]
  %v936 = vld [vmem:[%s898 + $0x128] sm:$0xff]
  %v937 = vld [vmem:[%s898 + $0x130] sm:$0xff]
  %v938 = vld [vmem:[%s898 + $0x138] sm:$0xff]
  %v939 = vld [vmem:[%s898 + $0x140] sm:$0xff]
  %v940 = vld [vmem:[%s898 + $0x148] sm:$0xff]
  %v941 = vld [vmem:[%s898 + $0x150] sm:$0xff]
  %v942 = vld [vmem:[%s898 + $0x158] sm:$0xff]
  %v943 = vld [vmem:[%s898 + $0x160] sm:$0xff]
  %v944 = vld [vmem:[%s898 + $0x168] sm:$0xff]
  %v945 = vld [vmem:[%s898 + $0x170] sm:$0xff]
  %v946 = vld [vmem:[%s898 + $0x178] sm:$0xff]
  %v947 = vld [vmem:[%s898 + $0x180] sm:$0xff]
  %v948 = vld [vmem:[%s898 + $0x188] sm:$0xff]
  %v949 = vld [vmem:[%s898 + $0x190] sm:$0xff]
  %v950 = vld [vmem:[%s898 + $0x198] sm:$0xff]
  %v951 = vld [vmem:[%s898 + $0x1a0] sm:$0xff]
  %v952 = vld [vmem:[%s898 + $0x1a8] sm:$0xff]
  %v953 = vld [vmem:[%s898 + $0x1b0] sm:$0xff]
  %v954 = vld [vmem:[%s898 + $0x1b8] sm:$0xff]
  %v955 = vld [vmem:[%s898 + $0x1c0] sm:$0xff]
  %v956 = vld [vmem:[%s898 + $0x1c8] sm:$0xff]
  %v957 = vld [vmem:[%s898 + $0x1d0] sm:$0xff]
  %v958 = vld [vmem:[%s898 + $0x1d8] sm:$0xff]
  %v959 = vsel %vm194, %v879, 0
  %v961 = vsel %vm194, %v883, 0
  %v963 = vsel %vm194, %v889, 0
  %v965 = vsel %vm194, %v893, 0
  %967 = vmatprep.subr.mxu0 %v945
  %968 = vmatpush1.msra.mxu0 %v944
  %969 = vmatprep.subr.mxu0 %v942
  %970 = vmatpush1.msra.mxu0 %v941
  %971 = vmatprep.subr.mxu0 %v939
  %972 = vmatpush1.msra.mxu0 %v938
  %973 = vmatprep.subr.mxu0 %v936
  %974 = vmatpush1.msra.mxu0 %v935
  %975 = vmatprep.subr.mxu0 %v933
  %976 = vmatpush1.msra.mxu0 %v932
  %977 = vmatprep.subr.mxu0 %v930
  %978 = vmatpush1.msra.mxu0 %v929
  %979 = vmatprep.subr.mxu0 %v927
  %980 = vmatpush1.msra.mxu0 %v926
  %981 = vmatprep.subr.mxu0 %v924
  %982 = vmatpush1.msra.mxu0 %v923
  %983 = vmatprep.subr.mxu0 %v921
  %984 = vmatpush1.msra.mxu0 %v920
  %985 = vmatprep.subr.mxu0 %v918
  %986 = vmatpush1.msra.mxu0 %v917
  %987 = vmatprep.subr.mxu0 %v915
  %988 = vmatpush1.msra.mxu0 %v914
  %989 = vmatprep.subr.mxu0 %v912
  %990 = vmatpush1.msra.mxu0 %v911
  %991 = vmatprep.subr.mxu0 %v909
  %992 = vmatpush1.msra.mxu0 %v908
  %993 = vmatprep.subr.mxu0 %v906
  %994 = vmatpush1.msra.mxu0 %v905
  %995 = vmatprep.subr.mxu0 %v903
  %996 = vmatpush1.msra.mxu0 %v902
  %997 = vmatprep.subr.mxu0 %v900
  %998 = vmatpush1.msra.mxu0 %v899
  %999 = vmatprep.subr.mxu0 0.0
  %1000 = vmatpush2.msra.mxu0 0.0
  %1001 = vmatprep.subr.mxu0 0.0
  %1002 = vmatpush2.msra.mxu0 0.0
  %1003 = vmatprep.subr.mxu0 0.0
  %1004 = vmatpush2.msra.mxu0 0.0
  %1005 = vmatprep.subr.mxu0 0.0
  %1006 = vmatpush2.msra.mxu0 0.0
  %1007 = vmatprep.subr.mxu0 0.0
  %1008 = vmatpush2.msra.mxu0 0.0
  %1009 = vmatprep.subr.mxu0 0.0
  %1010 = vmatpush2.msra.mxu0 0.0
  %1011 = vmatprep.subr.mxu0 0.0
  %1012 = vmatpush2.msra.mxu0 0.0
  %1013 = vmatprep.subr.mxu0 0.0
  %1014 = vmatpush2.msra.mxu0 0.0
  %1015 = vmatprep.subr.mxu0 0.0
  %1016 = vmatpush2.msra.mxu0 0.0
  %1017 = vmatprep.subr.mxu0 0.0
  %1018 = vmatpush2.msra.mxu0 0.0
  %1019 = vmatprep.subr.mxu0 0.0
  %1020 = vmatpush2.msra.mxu0 0.0
  %1021 = vmatprep.subr.mxu0 0.0
  %1022 = vmatpush2.msra.mxu0 0.0
  %1023 = vmatprep.subr.mxu0 %v957
  %1024 = vmatpush2.msra.mxu0 %v956
  %1025 = vmatprep.subr.mxu0 %v954
  %1026 = vmatpush2.msra.mxu0 %v953
  %1027 = vmatprep.subr.mxu0 %v951
  %1028 = vmatpush2.msra.mxu0 %v950
  %1029 = vmatprep.subr.mxu0 %v948
  %1030 = vmatpush2.msra.mxu0 %v947
  %1031 = vmatprep.mubr.f32.mxu0 %v959
  %1032 = vmatmul.mubr.f32.gmra.mxu0 %v876
  %v1033 = vpop.f32.mrf.mxu0
  %v1034 = vadd.f32 0.0, %v1033
  %v1035 = vpop.f32.mrf.mxu0
  %v1036 = vadd.f32 0.0, %v1035
  %1037 = vmatprep.mubr.f32.mxu0 %v961
  %1038 = vmatmul.mubr.f32.gmra.mxu0 %v881
  %v1039 = vpop.f32.mrf.mxu0
  %v1040 = vadd.f32 0.0, %v1039
  %v1041 = vpop.f32.mrf.mxu0
  %v1042 = vadd.f32 0.0, %v1041
  %1043 = vmatprep.mubr.f32.mxu0 %v963
  %1044 = vmatmul.mubr.f32.gmra.mxu0 %v886
  %v1045 = vpop.f32.mrf.mxu0
  %v1046 = vadd.f32 0.0, %v1045
  %v1047 = vpop.f32.mrf.mxu0
  %v1048 = vadd.f32 0.0, %v1047
  %1049 = vmatprep.mubr.f32.mxu0 %v965
  %1050 = vmatmul.mubr.f32.gmra.mxu0 %v891
  %v1051 = vpop.f32.mrf.mxu0
  %v1052 = vadd.f32 0.0, %v1051
  %v1053 = vpop.f32.mrf.mxu0
  %v1054 = vadd.f32 0.0, %v1053
  %1055 = vdwg.mxu0
  %1056 = vmatprep.subr.mxu0 0.0
  %1057 = vmatpush1.msra.mxu0 %v946
  %1058 = vmatprep.subr.mxu0 0.0
  %1059 = vmatpush1.msra.mxu0 %v943
  %1060 = vmatprep.subr.mxu0 0.0
  %1061 = vmatpush1.msra.mxu0 %v940
  %1062 = vmatprep.subr.mxu0 0.0
  %1063 = vmatpush1.msra.mxu0 %v937
  %1064 = vmatprep.subr.mxu0 0.0
  %1065 = vmatpush1.msra.mxu0 %v934
  %1066 = vmatprep.subr.mxu0 0.0
  %1067 = vmatpush1.msra.mxu0 %v931
  %1068 = vmatprep.subr.mxu0 0.0
  %1069 = vmatpush1.msra.mxu0 %v928
  %1070 = vmatprep.subr.mxu0 0.0
  %1071 = vmatpush1.msra.mxu0 %v925
  %1072 = vmatprep.subr.mxu0 0.0
  %1073 = vmatpush1.msra.mxu0 %v922
  %1074 = vmatprep.subr.mxu0 0.0
  %1075 = vmatpush1.msra.mxu0 %v919
  %1076 = vmatprep.subr.mxu0 0.0
  %1077 = vmatpush1.msra.mxu0 %v916
  %1078 = vmatprep.subr.mxu0 0.0
  %1079 = vmatpush1.msra.mxu0 %v913
  %1080 = vmatprep.subr.mxu0 0.0
  %1081 = vmatpush1.msra.mxu0 %v910
  %1082 = vmatprep.subr.mxu0 0.0
  %1083 = vmatpush1.msra.mxu0 %v907
  %1084 = vmatprep.subr.mxu0 0.0
  %1085 = vmatpush1.msra.mxu0 %v904
  %1086 = vmatprep.subr.mxu0 0.0
  %1087 = vmatpush1.msra.mxu0 %v901
  %1088 = vmatprep.subr.mxu0 0.0
  %1089 = vmatpush2.msra.mxu0 0.0
  %1090 = vmatprep.subr.mxu0 0.0
  %1091 = vmatpush2.msra.mxu0 0.0
  %1092 = vmatprep.subr.mxu0 0.0
  %1093 = vmatpush2.msra.mxu0 0.0
  %1094 = vmatprep.subr.mxu0 0.0
  %1095 = vmatpush2.msra.mxu0 0.0
  %1096 = vmatprep.subr.mxu0 0.0
  %1097 = vmatpush2.msra.mxu0 0.0
  %1098 = vmatprep.subr.mxu0 0.0
  %1099 = vmatpush2.msra.mxu0 0.0
  %1100 = vmatprep.subr.mxu0 0.0
  %1101 = vmatpush2.msra.mxu0 0.0
  %1102 = vmatprep.subr.mxu0 0.0
  %1103 = vmatpush2.msra.mxu0 0.0
  %1104 = vmatprep.subr.mxu0 0.0
  %1105 = vmatpush2.msra.mxu0 0.0
  %1106 = vmatprep.subr.mxu0 0.0
  %1107 = vmatpush2.msra.mxu0 0.0
  %1108 = vmatprep.subr.mxu0 0.0
  %1109 = vmatpush2.msra.mxu0 0.0
  %1110 = vmatprep.subr.mxu0 0.0
  %1111 = vmatpush2.msra.mxu0 0.0
  %1112 = vmatprep.subr.mxu0 0.0
  %1113 = vmatpush2.msra.mxu0 %v958
  %1114 = vmatprep.subr.mxu0 0.0
  %1115 = vmatpush2.msra.mxu0 %v955
  %1116 = vmatprep.subr.mxu0 0.0
  %1117 = vmatpush2.msra.mxu0 %v952
  %1118 = vmatprep.subr.mxu0 0.0
  %1119 = vmatpush2.msra.mxu0 %v949
  %1120 = vmatprep.mubr.f32.mxu0 %v959
  %1121 = vmatmul.mubr.f32.gmra.mxu0 %v876
  %v1122 = vpop.f32.mrf.mxu0
  %v1123 = vadd.f32 0.0, %v1122
  %v1124 = vpop.f32.mrf.mxu0
  %1125 = vmatprep.mubr.f32.mxu0 %v961
  %1126 = vmatmul.mubr.f32.gmra.mxu0 %v881
  %v1127 = vpop.f32.mrf.mxu0
  %v1128 = vadd.f32 0.0, %v1127
  %v1129 = vpop.f32.mrf.mxu0
  %1130 = vmatprep.mubr.f32.mxu0 %v963
  %1131 = vmatmul.mubr.f32.gmra.mxu0 %v886
  %v1132 = vpop.f32.mrf.mxu0
  %v1133 = vadd.f32 0.0, %v1132
  %v1134 = vpop.f32.mrf.mxu0
  %1135 = vmatprep.mubr.f32.mxu0 %v965
  %1136 = vmatmul.mubr.f32.gmra.mxu0 %v891
  %v1137 = vpop.f32.mrf.mxu0
  %v1138 = vadd.f32 0.0, %v1137
  %v1139 = vpop.f32.mrf.mxu0
  %1140 = vdwg.mxu0
  %v1141 = vadd.f32 %v845, %v1034
  %v1142 = vadd.f32 %v846, %v1036
  %v1143 = vadd.f32 %v847, %v1123
  %v1144 = vadd.f32 %v848, %v1040
  %v1145 = vadd.f32 %v849, %v1042
  %v1146 = vadd.f32 %v850, %v1128
  %v1147 = vadd.f32 %v851, %v1046
  %v1148 = vadd.f32 %v852, %v1048
  %v1149 = vadd.f32 %v853, %v1133
  %v1150 = vadd.f32 %v854, %v1052
  %v1151 = vadd.f32 %v855, %v1054
  %v1152 = vadd.f32 %v856, %v1138
  %v1153 = vld [vmem:[%s0] sm:$0xf0]
  %v1154 = vld [vmem:[%s0 + $0x8] sm:$0xf0]
  %v1155 = vld [vmem:[%s0 + $0x20] sm:$0xf]
  %v1156 = vld [vmem:[%s0 + $0x28] sm:$0xf]
  %v1157 = vld [vmem:[%s0 + $0x30] sm:$0xf0]
  %v1158 = vld [vmem:[%s0 + $0x38] sm:$0xf0]
  %v1159 = vld [vmem:[%s0 + $0x50] sm:$0xf]
  %v1160 = vld [vmem:[%s0 + $0x58] sm:$0xf]
  %vm1169 = vcmask 1043456
  %v1170 = vrot.slane %v1153, 4
  %v1171 = vrot.slane %v22, 4
  %v1172 = vsel %vm1169, %v1170, %v1171
  %v1173 = vrot.slane %v1154, 4
  %v1174 = vrot.slane %v23, 4
  %v1175 = vsel %vm1169, %v1173, %v1174
  %v1176 = vrot.slane %v1155, 4
  %v1177 = vsel %vm1169, %v1171, %v1176
  %v1178 = vrot.slane %v1156, 4
  %v1179 = vsel %vm1169, %v1174, %v1178
  %v1180 = vrot.slane %v1157, 4
  %v1181 = vrot.slane %v26, 4
  %v1182 = vsel %vm1169, %v1180, %v1181
  %v1183 = vrot.slane %v1158, 4
  %v1184 = vrot.slane %v27, 4
  %v1185 = vsel %vm1169, %v1183, %v1184
  %v1186 = vrot.slane %v1159, 4
  %v1187 = vsel %vm1169, %v1181, %v1186
  %v1188 = vrot.slane %v1160, 4
  %v1189 = vsel %vm1169, %v1184, %v1188
  %s1194 = scalar_lea.vmem %s1, 1920
  %v1195 = vld [vmem:[%s1194] sm:$0xff]
  %v1196 = vld [vmem:[%s1194 + $0x8] sm:$0xff]
  %v1197 = vld [vmem:[%s1194 + $0x10] sm:$0xff]
  %v1198 = vld [vmem:[%s1194 + $0x18] sm:$0xff]
  %v1199 = vld [vmem:[%s1194 + $0x20] sm:$0xff]
  %v1200 = vld [vmem:[%s1194 + $0x28] sm:$0xff]
  %v1201 = vld [vmem:[%s1194 + $0x30] sm:$0xff]
  %v1202 = vld [vmem:[%s1194 + $0x38] sm:$0xff]
  %v1203 = vld [vmem:[%s1194 + $0x40] sm:$0xff]
  %v1204 = vld [vmem:[%s1194 + $0x48] sm:$0xff]
  %v1205 = vld [vmem:[%s1194 + $0x50] sm:$0xff]
  %v1206 = vld [vmem:[%s1194 + $0x58] sm:$0xff]
  %v1207 = vld [vmem:[%s1194 + $0x60] sm:$0xff]
  %v1208 = vld [vmem:[%s1194 + $0x68] sm:$0xff]
  %v1209 = vld [vmem:[%s1194 + $0x70] sm:$0xff]
  %v1210 = vld [vmem:[%s1194 + $0x78] sm:$0xff]
  %v1211 = vld [vmem:[%s1194 + $0x80] sm:$0xff]
  %v1212 = vld [vmem:[%s1194 + $0x88] sm:$0xff]
  %v1213 = vld [vmem:[%s1194 + $0x90] sm:$0xff]
  %v1214 = vld [vmem:[%s1194 + $0x98] sm:$0xff]
  %v1215 = vld [vmem:[%s1194 + $0xa0] sm:$0xff]
  %v1216 = vld [vmem:[%s1194 + $0xa8] sm:$0xff]
  %v1217 = vld [vmem:[%s1194 + $0xb0] sm:$0xff]
  %v1218 = vld [vmem:[%s1194 + $0xb8] sm:$0xff]
  %v1219 = vld [vmem:[%s1194 + $0xc0] sm:$0xff]
  %v1220 = vld [vmem:[%s1194 + $0xc8] sm:$0xff]
  %v1221 = vld [vmem:[%s1194 + $0xd0] sm:$0xff]
  %v1222 = vld [vmem:[%s1194 + $0xd8] sm:$0xff]
  %v1223 = vld [vmem:[%s1194 + $0xe0] sm:$0xff]
  %v1224 = vld [vmem:[%s1194 + $0xe8] sm:$0xff]
  %v1225 = vld [vmem:[%s1194 + $0xf0] sm:$0xff]
  %v1226 = vld [vmem:[%s1194 + $0xf8] sm:$0xff]
  %v1227 = vld [vmem:[%s1194 + $0x100] sm:$0xff]
  %v1228 = vld [vmem:[%s1194 + $0x108] sm:$0xff]
  %v1229 = vld [vmem:[%s1194 + $0x110] sm:$0xff]
  %v1230 = vld [vmem:[%s1194 + $0x118] sm:$0xff]
  %v1231 = vld [vmem:[%s1194 + $0x120] sm:$0xff]
  %v1232 = vld [vmem:[%s1194 + $0x128] sm:$0xff]
  %v1233 = vld [vmem:[%s1194 + $0x130] sm:$0xff]
  %v1234 = vld [vmem:[%s1194 + $0x138] sm:$0xff]
  %v1235 = vld [vmem:[%s1194 + $0x140] sm:$0xff]
  %v1236 = vld [vmem:[%s1194 + $0x148] sm:$0xff]
  %v1237 = vld [vmem:[%s1194 + $0x150] sm:$0xff]
  %v1238 = vld [vmem:[%s1194 + $0x158] sm:$0xff]
  %v1239 = vld [vmem:[%s1194 + $0x160] sm:$0xff]
  %v1240 = vld [vmem:[%s1194 + $0x168] sm:$0xff]
  %v1241 = vld [vmem:[%s1194 + $0x170] sm:$0xff]
  %v1242 = vld [vmem:[%s1194 + $0x178] sm:$0xff]
  %v1243 = vld [vmem:[%s1194 + $0x180] sm:$0xff]
  %v1244 = vld [vmem:[%s1194 + $0x188] sm:$0xff]
  %v1245 = vld [vmem:[%s1194 + $0x190] sm:$0xff]
  %v1246 = vld [vmem:[%s1194 + $0x198] sm:$0xff]
  %v1247 = vld [vmem:[%s1194 + $0x1a0] sm:$0xff]
  %v1248 = vld [vmem:[%s1194 + $0x1a8] sm:$0xff]
  %v1249 = vld [vmem:[%s1194 + $0x1b0] sm:$0xff]
  %v1250 = vld [vmem:[%s1194 + $0x1b8] sm:$0xff]
  %v1251 = vld [vmem:[%s1194 + $0x1c0] sm:$0xff]
  %v1252 = vld [vmem:[%s1194 + $0x1c8] sm:$0xff]
  %v1253 = vld [vmem:[%s1194 + $0x1d0] sm:$0xff]
  %v1254 = vld [vmem:[%s1194 + $0x1d8] sm:$0xff]
  %v1255 = vsel %vm194, %v1175, 0
  %v1257 = vsel %vm194, %v1179, 0
  %v1259 = vsel %vm194, %v1185, 0
  %v1261 = vsel %vm194, %v1189, 0
  %1263 = vmatprep.subr.mxu0 %v1241
  %1264 = vmatpush1.msra.mxu0 %v1240
  %1265 = vmatprep.subr.mxu0 %v1238
  %1266 = vmatpush1.msra.mxu0 %v1237
  %1267 = vmatprep.subr.mxu0 %v1235
  %1268 = vmatpush1.msra.mxu0 %v1234
  %1269 = vmatprep.subr.mxu0 %v1232
  %1270 = vmatpush1.msra.mxu0 %v1231
  %1271 = vmatprep.subr.mxu0 %v1229
  %1272 = vmatpush1.msra.mxu0 %v1228
  %1273 = vmatprep.subr.mxu0 %v1226
  %1274 = vmatpush1.msra.mxu0 %v1225
  %1275 = vmatprep.subr.mxu0 %v1223
  %1276 = vmatpush1.msra.mxu0 %v1222
  %1277 = vmatprep.subr.mxu0 %v1220
  %1278 = vmatpush1.msra.mxu0 %v1219
  %1279 = vmatprep.subr.mxu0 %v1217
  %1280 = vmatpush1.msra.mxu0 %v1216
  %1281 = vmatprep.subr.mxu0 %v1214
  %1282 = vmatpush1.msra.mxu0 %v1213
  %1283 = vmatprep.subr.mxu0 %v1211
  %1284 = vmatpush1.msra.mxu0 %v1210
  %1285 = vmatprep.subr.mxu0 %v1208
  %1286 = vmatpush1.msra.mxu0 %v1207
  %1287 = vmatprep.subr.mxu0 %v1205
  %1288 = vmatpush1.msra.mxu0 %v1204
  %1289 = vmatprep.subr.mxu0 %v1202
  %1290 = vmatpush1.msra.mxu0 %v1201
  %1291 = vmatprep.subr.mxu0 %v1199
  %1292 = vmatpush1.msra.mxu0 %v1198
  %1293 = vmatprep.subr.mxu0 %v1196
  %1294 = vmatpush1.msra.mxu0 %v1195
  %1295 = vmatprep.subr.mxu0 0.0
  %1296 = vmatpush2.msra.mxu0 0.0
  %1297 = vmatprep.subr.mxu0 0.0
  %1298 = vmatpush2.msra.mxu0 0.0
  %1299 = vmatprep.subr.mxu0 0.0
  %1300 = vmatpush2.msra.mxu0 0.0
  %1301 = vmatprep.subr.mxu0 0.0
  %1302 = vmatpush2.msra.mxu0 0.0
  %1303 = vmatprep.subr.mxu0 0.0
  %1304 = vmatpush2.msra.mxu0 0.0
  %1305 = vmatprep.subr.mxu0 0.0
  %1306 = vmatpush2.msra.mxu0 0.0
  %1307 = vmatprep.subr.mxu0 0.0
  %1308 = vmatpush2.msra.mxu0 0.0
  %1309 = vmatprep.subr.mxu0 0.0
  %1310 = vmatpush2.msra.mxu0 0.0
  %1311 = vmatprep.subr.mxu0 0.0
  %1312 = vmatpush2.msra.mxu0 0.0
  %1313 = vmatprep.subr.mxu0 0.0
  %1314 = vmatpush2.msra.mxu0 0.0
  %1315 = vmatprep.subr.mxu0 0.0
  %1316 = vmatpush2.msra.mxu0 0.0
  %1317 = vmatprep.subr.mxu0 0.0
  %1318 = vmatpush2.msra.mxu0 0.0
  %1319 = vmatprep.subr.mxu0 %v1253
  %1320 = vmatpush2.msra.mxu0 %v1252
  %1321 = vmatprep.subr.mxu0 %v1250
  %1322 = vmatpush2.msra.mxu0 %v1249
  %1323 = vmatprep.subr.mxu0 %v1247
  %1324 = vmatpush2.msra.mxu0 %v1246
  %1325 = vmatprep.subr.mxu0 %v1244
  %1326 = vmatpush2.msra.mxu0 %v1243
  %1327 = vmatprep.mubr.f32.mxu0 %v1255
  %1328 = vmatmul.mubr.f32.gmra.mxu0 %v1172
  %v1329 = vpop.f32.mrf.mxu0
  %v1330 = vadd.f32 0.0, %v1329
  %v1331 = vpop.f32.mrf.mxu0
  %v1332 = vadd.f32 0.0, %v1331
  %1333 = vmatprep.mubr.f32.mxu0 %v1257
  %1334 = vmatmul.mubr.f32.gmra.mxu0 %v1177
  %v1335 = vpop.f32.mrf.mxu0
  %v1336 = vadd.f32 0.0, %v1335
  %v1337 = vpop.f32.mrf.mxu0
  %v1338 = vadd.f32 0.0, %v1337
  %1339 = vmatprep.mubr.f32.mxu0 %v1259
  %1340 = vmatmul.mubr.f32.gmra.mxu0 %v1182
  %v1341 = vpop.f32.mrf.mxu0
  %v1342 = vadd.f32 0.0, %v1341
  %v1343 = vpop.f32.mrf.mxu0
  %v1344 = vadd.f32 0.0, %v1343
  %1345 = vmatprep.mubr.f32.mxu0 %v1261
  %1346 = vmatmul.mubr.f32.gmra.mxu0 %v1187
  %v1347 = vpop.f32.mrf.mxu0
  %v1348 = vadd.f32 0.0, %v1347
  %v1349 = vpop.f32.mrf.mxu0
  %v1350 = vadd.f32 0.0, %v1349
  %1351 = vdwg.mxu0
  %1352 = vmatprep.subr.mxu0 0.0
  %1353 = vmatpush1.msra.mxu0 %v1242
  %1354 = vmatprep.subr.mxu0 0.0
  %1355 = vmatpush1.msra.mxu0 %v1239
  %1356 = vmatprep.subr.mxu0 0.0
  %1357 = vmatpush1.msra.mxu0 %v1236
  %1358 = vmatprep.subr.mxu0 0.0
  %1359 = vmatpush1.msra.mxu0 %v1233
  %1360 = vmatprep.subr.mxu0 0.0
  %1361 = vmatpush1.msra.mxu0 %v1230
  %1362 = vmatprep.subr.mxu0 0.0
  %1363 = vmatpush1.msra.mxu0 %v1227
  %1364 = vmatprep.subr.mxu0 0.0
  %1365 = vmatpush1.msra.mxu0 %v1224
  %1366 = vmatprep.subr.mxu0 0.0
  %1367 = vmatpush1.msra.mxu0 %v1221
  %1368 = vmatprep.subr.mxu0 0.0
  %1369 = vmatpush1.msra.mxu0 %v1218
  %1370 = vmatprep.subr.mxu0 0.0
  %1371 = vmatpush1.msra.mxu0 %v1215
  %1372 = vmatprep.subr.mxu0 0.0
  %1373 = vmatpush1.msra.mxu0 %v1212
  %1374 = vmatprep.subr.mxu0 0.0
  %1375 = vmatpush1.msra.mxu0 %v1209
  %1376 = vmatprep.subr.mxu0 0.0
  %1377 = vmatpush1.msra.mxu0 %v1206
  %1378 = vmatprep.subr.mxu0 0.0
  %1379 = vmatpush1.msra.mxu0 %v1203
  %1380 = vmatprep.subr.mxu0 0.0
  %1381 = vmatpush1.msra.mxu0 %v1200
  %1382 = vmatprep.subr.mxu0 0.0
  %1383 = vmatpush1.msra.mxu0 %v1197
  %1384 = vmatprep.subr.mxu0 0.0
  %1385 = vmatpush2.msra.mxu0 0.0
  %1386 = vmatprep.subr.mxu0 0.0
  %1387 = vmatpush2.msra.mxu0 0.0
  %1388 = vmatprep.subr.mxu0 0.0
  %1389 = vmatpush2.msra.mxu0 0.0
  %1390 = vmatprep.subr.mxu0 0.0
  %1391 = vmatpush2.msra.mxu0 0.0
  %1392 = vmatprep.subr.mxu0 0.0
  %1393 = vmatpush2.msra.mxu0 0.0
  %1394 = vmatprep.subr.mxu0 0.0
  %1395 = vmatpush2.msra.mxu0 0.0
  %1396 = vmatprep.subr.mxu0 0.0
  %1397 = vmatpush2.msra.mxu0 0.0
  %1398 = vmatprep.subr.mxu0 0.0
  %1399 = vmatpush2.msra.mxu0 0.0
  %1400 = vmatprep.subr.mxu0 0.0
  %1401 = vmatpush2.msra.mxu0 0.0
  %1402 = vmatprep.subr.mxu0 0.0
  %1403 = vmatpush2.msra.mxu0 0.0
  %1404 = vmatprep.subr.mxu0 0.0
  %1405 = vmatpush2.msra.mxu0 0.0
  %1406 = vmatprep.subr.mxu0 0.0
  %1407 = vmatpush2.msra.mxu0 0.0
  %1408 = vmatprep.subr.mxu0 0.0
  %1409 = vmatpush2.msra.mxu0 %v1254
  %1410 = vmatprep.subr.mxu0 0.0
  %1411 = vmatpush2.msra.mxu0 %v1251
  %1412 = vmatprep.subr.mxu0 0.0
  %1413 = vmatpush2.msra.mxu0 %v1248
  %1414 = vmatprep.subr.mxu0 0.0
  %1415 = vmatpush2.msra.mxu0 %v1245
  %1416 = vmatprep.mubr.f32.mxu0 %v1255
  %1417 = vmatmul.mubr.f32.gmra.mxu0 %v1172
  %v1418 = vpop.f32.mrf.mxu0
  %v1419 = vadd.f32 0.0, %v1418
  %v1420 = vpop.f32.mrf.mxu0
  %1421 = vmatprep.mubr.f32.mxu0 %v1257
  %1422 = vmatmul.mubr.f32.gmra.mxu0 %v1177
  %v1423 = vpop.f32.mrf.mxu0
  %v1424 = vadd.f32 0.0, %v1423
  %v1425 = vpop.f32.mrf.mxu0
  %1426 = vmatprep.mubr.f32.mxu0 %v1259
  %1427 = vmatmul.mubr.f32.gmra.mxu0 %v1182
  %v1428 = vpop.f32.mrf.mxu0
  %v1429 = vadd.f32 0.0, %v1428
  %v1430 = vpop.f32.mrf.mxu0
  %1431 = vmatprep.mubr.f32.mxu0 %v1261
  %1432 = vmatmul.mubr.f32.gmra.mxu0 %v1187
  %v1433 = vpop.f32.mrf.mxu0
  %v1434 = vadd.f32 0.0, %v1433
  %v1435 = vpop.f32.mrf.mxu0
  %1436 = vdwg.mxu0
  %v1437 = vadd.f32 %v1141, %v1330
  %v1438 = vadd.f32 %v1142, %v1332
  %v1439 = vadd.f32 %v1143, %v1419
  %v1440 = vadd.f32 %v1144, %v1336
  %v1441 = vadd.f32 %v1145, %v1338
  %v1442 = vadd.f32 %v1146, %v1424
  %v1443 = vadd.f32 %v1147, %v1342
  %v1444 = vadd.f32 %v1148, %v1344
  %v1445 = vadd.f32 %v1149, %v1429
  %v1446 = vadd.f32 %v1150, %v1348
  %v1447 = vadd.f32 %v1151, %v1350
  %v1448 = vadd.f32 %v1152, %v1434
  %v1449 = vld [vmem:[%s2] sm:$0x7]
  %v1451 = vlaneseq
  %v1452 = vshrl.u32 %v1451, 7
  %v1453 = vsub.s32 0, %v1452
  %v1454 = vrot.slane %v1449, %v1453
  %v1455 = vlaneseq
  %v1456 = vshrl.u32 %v1455, 7
  %v1457 = vsub.s32 1, %v1456
  %v1458 = vrot.slane %v1449, %v1457
  %v1459 = vlaneseq
  %v1460 = vshrl.u32 %v1459, 7
  %v1461 = vsub.s32 2, %v1460
  %v1462 = vrot.slane %v1449, %v1461
  %v1466 = vadd.f32 %v1437, %v1454
  %v1467 = vadd.f32 %v1438, %v1458
  %v1468 = vadd.f32 %v1439, %v1462
  %v1469 = vadd.f32 %v1440, %v1454
  %v1470 = vadd.f32 %v1441, %v1458
  %v1471 = vadd.f32 %v1442, %v1462
  %v1472 = vadd.f32 %v1443, %v1454
  %v1473 = vadd.f32 %v1444, %v1458
  %v1474 = vadd.f32 %v1445, %v1462
  %v1475 = vadd.f32 %v1446, %v1454
  %v1476 = vadd.f32 %v1447, %v1458
  %v1477 = vadd.f32 %v1448, %v1462
  %v1478 = vmax.f32 %v1466, 0.0
  %v1479 = vmax.f32 %v1467, 0.0
  %v1480 = vmax.f32 %v1468, 0.0
  %v1481 = vmax.f32 %v1469, 0.0
  %v1482 = vmax.f32 %v1470, 0.0
  %v1483 = vmax.f32 %v1471, 0.0
  %v1484 = vmax.f32 %v1472, 0.0
  %v1485 = vmax.f32 %v1473, 0.0
  %v1486 = vmax.f32 %v1474, 0.0
  %v1487 = vmax.f32 %v1475, 0.0
  %v1488 = vmax.f32 %v1476, 0.0
  %v1489 = vmax.f32 %v1477, 0.0
  %vm1502 = vcmask 1040384
  %v1503 = vrot.slane %v1478, 7
  %v1504 = vrot.slane %v1479, 7
  %v1505 = vrot.slane %v1480, 7
  %v1506 = vrot.slane %v1481, 7
  %v1507 = vsel %vm1502, %v1503, %v1506
  %v1508 = vrot.slane %v1482, 7
  %v1509 = vsel %vm1502, %v1504, %v1508
  %v1510 = vrot.slane %v1483, 7
  %v1511 = vsel %vm1502, %v1505, %v1510
  %v1512 = vrot.slane %v1484, 7
  %v1513 = vrot.slane %v1485, 7
  %v1514 = vrot.slane %v1486, 7
  %v1515 = vrot.slane %v1487, 7
  %v1516 = vsel %vm1502, %v1512, %v1515
  %v1517 = vrot.slane %v1488, 7
  %v1518 = vsel %vm1502, %v1513, %v1517
  %v1519 = vrot.slane %v1489, 7
  %v1520 = vsel %vm1502, %v1514, %v1519
  %v1539 = vsel %vm1502, 0.0, %v1503
  %v1540 = vsel %vm1502, 0.0, %v1504
  %v1541 = vsel %vm1502, 0.0, %v1505
  %v1542 = vsel %vm1502, 0.0, %v1512
  %v1543 = vsel %vm1502, 0.0, %v1513
  %v1544 = vsel %vm1502, 0.0, %v1514
  %v1545 = vsel %vm1502, %v1506, 0.0
  %v1546 = vsel %vm1502, %v1508, 0.0
  %v1547 = vsel %vm1502, %v1510, 0.0
  %v1548 = vsel %vm1502, %v1515, 0.0
  %v1549 = vsel %vm1502, %v1517, 0.0
  %v1550 = vsel %vm1502, %v1519, 0.0
  %v1551 = vld [vmem:[%s3] sm:$0xff]
  %v1552 = vld [vmem:[%s3 + $0x8] sm:$0xff]
  %v1553 = vld [vmem:[%s3 + $0x10] sm:$0xff]
  %v1554 = vld [vmem:[%s3 + $0x18] sm:$0xff]
  %v1555 = vld [vmem:[%s3 + $0x20] sm:$0xff]
  %v1556 = vld [vmem:[%s3 + $0x28] sm:$0xff]
  %v1557 = vld [vmem:[%s3 + $0x30] sm:$0xff]
  %v1558 = vld [vmem:[%s3 + $0x38] sm:$0xff]
  %v1559 = vld [vmem:[%s3 + $0x40] sm:$0xff]
  %v1560 = vld [vmem:[%s3 + $0x48] sm:$0xff]
  %v1561 = vld [vmem:[%s3 + $0x50] sm:$0xff]
  %v1562 = vld [vmem:[%s3 + $0x58] sm:$0xff]
  %v1563 = vld [vmem:[%s3 + $0x60] sm:$0xff]
  %v1564 = vld [vmem:[%s3 + $0x68] sm:$0xff]
  %v1565 = vld [vmem:[%s3 + $0x70] sm:$0xff]
  %v1566 = vld [vmem:[%s3 + $0x78] sm:$0xff]
  %v1567 = vld [vmem:[%s3 + $0x80] sm:$0xff]
  %v1568 = vld [vmem:[%s3 + $0x88] sm:$0xff]
  %v1569 = vld [vmem:[%s3 + $0x90] sm:$0xff]
  %v1570 = vld [vmem:[%s3 + $0x98] sm:$0xff]
  %v1571 = vld [vmem:[%s3 + $0xa0] sm:$0xff]
  %v1572 = vld [vmem:[%s3 + $0xa8] sm:$0xff]
  %v1573 = vld [vmem:[%s3 + $0xb0] sm:$0xff]
  %v1574 = vld [vmem:[%s3 + $0xb8] sm:$0xff]
  %v1575 = vld [vmem:[%s3 + $0xc0] sm:$0xff]
  %v1576 = vld [vmem:[%s3 + $0xc8] sm:$0xff]
  %v1577 = vld [vmem:[%s3 + $0xd0] sm:$0xff]
  %v1578 = vld [vmem:[%s3 + $0xd8] sm:$0xff]
  %v1579 = vld [vmem:[%s3 + $0xe0] sm:$0xff]
  %v1580 = vld [vmem:[%s3 + $0xe8] sm:$0xff]
  %v1581 = vld [vmem:[%s3 + $0xf0] sm:$0xff]
  %v1582 = vld [vmem:[%s3 + $0xf8] sm:$0xff]
  %v1583 = vld [vmem:[%s3 + $0x100] sm:$0xff]
  %v1584 = vld [vmem:[%s3 + $0x108] sm:$0xff]
  %v1585 = vld [vmem:[%s3 + $0x110] sm:$0xff]
  %v1586 = vld [vmem:[%s3 + $0x118] sm:$0xff]
  %v1587 = vld [vmem:[%s3 + $0x120] sm:$0xff]
  %v1588 = vld [vmem:[%s3 + $0x128] sm:$0xff]
  %v1589 = vld [vmem:[%s3 + $0x130] sm:$0xff]
  %v1590 = vld [vmem:[%s3 + $0x138] sm:$0xff]
  %v1591 = vld [vmem:[%s3 + $0x140] sm:$0xff]
  %v1592 = vld [vmem:[%s3 + $0x148] sm:$0xff]
  %v1593 = vld [vmem:[%s3 + $0x150] sm:$0xff]
  %v1594 = vld [vmem:[%s3 + $0x158] sm:$0xff]
  %v1595 = vld [vmem:[%s3 + $0x160] sm:$0xff]
  %v1596 = vld [vmem:[%s3 + $0x168] sm:$0xff]
  %v1597 = vld [vmem:[%s3 + $0x170] sm:$0xff]
  %v1598 = vld [vmem:[%s3 + $0x178] sm:$0xff]
  %v1611 = vrot.slane %v1539, 1
  %v1612 = vrot.slane %v1507, 1
  %v1613 = vsel %vm108, %v1611, %v1612
  %v1614 = vrot.slane %v1540, 1
  %v1615 = vrot.slane %v1509, 1
  %v1616 = vsel %vm108, %v1614, %v1615
  %v1617 = vrot.slane %v1541, 1
  %v1618 = vrot.slane %v1511, 1
  %v1619 = vsel %vm108, %v1617, %v1618
  %v1620 = vrot.slane %v1545, 1
  %v1621 = vsel %vm108, %v1612, %v1620
  %v1622 = vrot.slane %v1546, 1
  %v1623 = vsel %vm108, %v1615, %v1622
  %v1624 = vrot.slane %v1547, 1
  %v1625 = vsel %vm108, %v1618, %v1624
  %v1626 = vrot.slane %v1542, 1
  %v1627 = vrot.slane %v1516, 1
  %v1628 = vsel %vm108, %v1626, %v1627
  %v1629 = vrot.slane %v1543, 1
  %v1630 = vrot.slane %v1518, 1
  %v1631 = vsel %vm108, %v1629, %v1630
  %v1632 = vrot.slane %v1544, 1
  %v1633 = vrot.slane %v1520, 1
  %v1634 = vsel %vm108, %v1632, %v1633
  %v1635 = vrot.slane %v1548, 1
  %v1636 = vsel %vm108, %v1627, %v1635
  %v1637 = vrot.slane %v1549, 1
  %v1638 = vsel %vm108, %v1630, %v1637
  %v1639 = vrot.slane %v1550, 1
  %v1640 = vsel %vm108, %v1633, %v1639
  %s1653 = scalar_lea.vmem %s3, 384
  %v1654 = vld [vmem:[%s1653] sm:$0xff]
  %v1655 = vld [vmem:[%s1653 + $0x8] sm:$0xff]
  %v1656 = vld [vmem:[%s1653 + $0x10] sm:$0xff]
  %v1657 = vld [vmem:[%s1653 + $0x18] sm:$0xff]
  %v1658 = vld [vmem:[%s1653 + $0x20] sm:$0xff]
  %v1659 = vld [vmem:[%s1653 + $0x28] sm:$0xff]
  %v1660 = vld [vmem:[%s1653 + $0x30] sm:$0xff]
  %v1661 = vld [vmem:[%s1653 + $0x38] sm:$0xff]
  %v1662 = vld [vmem:[%s1653 + $0x40] sm:$0xff]
  %v1663 = vld [vmem:[%s1653 + $0x48] sm:$0xff]
  %v1664 = vld [vmem:[%s1653 + $0x50] sm:$0xff]
  %v1665 = vld [vmem:[%s1653 + $0x58] sm:$0xff]
  %v1666 = vld [vmem:[%s1653 + $0x60] sm:$0xff]
  %v1667 = vld [vmem:[%s1653 + $0x68] sm:$0xff]
  %v1668 = vld [vmem:[%s1653 + $0x70] sm:$0xff]
  %v1669 = vld [vmem:[%s1653 + $0x78] sm:$0xff]
  %v1670 = vld [vmem:[%s1653 + $0x80] sm:$0xff]
  %v1671 = vld [vmem:[%s1653 + $0x88] sm:$0xff]
  %v1672 = vld [vmem:[%s1653 + $0x90] sm:$0xff]
  %v1673 = vld [vmem:[%s1653 + $0x98] sm:$0xff]
  %v1674 = vld [vmem:[%s1653 + $0xa0] sm:$0xff]
  %v1675 = vld [vmem:[%s1653 + $0xa8] sm:$0xff]
  %v1676 = vld [vmem:[%s1653 + $0xb0] sm:$0xff]
  %v1677 = vld [vmem:[%s1653 + $0xb8] sm:$0xff]
  %v1678 = vld [vmem:[%s1653 + $0xc0] sm:$0xff]
  %v1679 = vld [vmem:[%s1653 + $0xc8] sm:$0xff]
  %v1680 = vld [vmem:[%s1653 + $0xd0] sm:$0xff]
  %v1681 = vld [vmem:[%s1653 + $0xd8] sm:$0xff]
  %v1682 = vld [vmem:[%s1653 + $0xe0] sm:$0xff]
  %v1683 = vld [vmem:[%s1653 + $0xe8] sm:$0xff]
  %v1684 = vld [vmem:[%s1653 + $0xf0] sm:$0xff]
  %v1685 = vld [vmem:[%s1653 + $0xf8] sm:$0xff]
  %v1686 = vld [vmem:[%s1653 + $0x100] sm:$0xff]
  %v1687 = vld [vmem:[%s1653 + $0x108] sm:$0xff]
  %v1688 = vld [vmem:[%s1653 + $0x110] sm:$0xff]
  %v1689 = vld [vmem:[%s1653 + $0x118] sm:$0xff]
  %v1690 = vld [vmem:[%s1653 + $0x120] sm:$0xff]
  %v1691 = vld [vmem:[%s1653 + $0x128] sm:$0xff]
  %v1692 = vld [vmem:[%s1653 + $0x130] sm:$0xff]
  %v1693 = vld [vmem:[%s1653 + $0x138] sm:$0xff]
  %v1694 = vld [vmem:[%s1653 + $0x140] sm:$0xff]
  %v1695 = vld [vmem:[%s1653 + $0x148] sm:$0xff]
  %v1696 = vld [vmem:[%s1653 + $0x150] sm:$0xff]
  %v1697 = vld [vmem:[%s1653 + $0x158] sm:$0xff]
  %v1698 = vld [vmem:[%s1653 + $0x160] sm:$0xff]
  %v1699 = vld [vmem:[%s1653 + $0x168] sm:$0xff]
  %v1700 = vld [vmem:[%s1653 + $0x170] sm:$0xff]
  %v1701 = vld [vmem:[%s1653 + $0x178] sm:$0xff]
  %1702 = vmatprep.subr.mxu0 0.0
  %1703 = vmatpush1.msra.mxu0 %v1669
  %1704 = vmatprep.subr.mxu0 0.0
  %1705 = vmatpush1.msra.mxu0 %v1668
  %1706 = vmatprep.subr.mxu0 0.0
  %1707 = vmatpush1.msra.mxu0 %v1667
  %1708 = vmatprep.subr.mxu0 0.0
  %1709 = vmatpush1.msra.mxu0 %v1666
  %1710 = vmatprep.subr.mxu0 0.0
  %1711 = vmatpush1.msra.mxu0 %v1665
  %1712 = vmatprep.subr.mxu0 0.0
  %1713 = vmatpush1.msra.mxu0 %v1664
  %1714 = vmatprep.subr.mxu0 0.0
  %1715 = vmatpush1.msra.mxu0 %v1663
  %1716 = vmatprep.subr.mxu0 0.0
  %1717 = vmatpush1.msra.mxu0 %v1662
  %1718 = vmatprep.subr.mxu0 0.0
  %1719 = vmatpush1.msra.mxu0 %v1661
  %1720 = vmatprep.subr.mxu0 0.0
  %1721 = vmatpush1.msra.mxu0 %v1660
  %1722 = vmatprep.subr.mxu0 0.0
  %1723 = vmatpush1.msra.mxu0 %v1659
  %1724 = vmatprep.subr.mxu0 0.0
  %1725 = vmatpush1.msra.mxu0 %v1658
  %1726 = vmatprep.subr.mxu0 0.0
  %1727 = vmatpush1.msra.mxu0 %v1657
  %1728 = vmatprep.subr.mxu0 0.0
  %1729 = vmatpush1.msra.mxu0 %v1656
  %1730 = vmatprep.subr.mxu0 0.0
  %1731 = vmatpush1.msra.mxu0 %v1655
  %1732 = vmatprep.subr.mxu0 0.0
  %1733 = vmatpush1.msra.mxu0 %v1654
  %1734 = vmatprep.subr.mxu0 0.0
  %1735 = vmatpush2.msra.mxu0 %v1685
  %1736 = vmatprep.subr.mxu0 0.0
  %1737 = vmatpush2.msra.mxu0 %v1684
  %1738 = vmatprep.subr.mxu0 0.0
  %1739 = vmatpush2.msra.mxu0 %v1683
  %1740 = vmatprep.subr.mxu0 0.0
  %1741 = vmatpush2.msra.mxu0 %v1682
  %1742 = vmatprep.subr.mxu0 0.0
  %1743 = vmatpush2.msra.mxu0 %v1681
  %1744 = vmatprep.subr.mxu0 0.0
  %1745 = vmatpush2.msra.mxu0 %v1680
  %1746 = vmatprep.subr.mxu0 0.0
  %1747 = vmatpush2.msra.mxu0 %v1679
  %1748 = vmatprep.subr.mxu0 0.0
  %1749 = vmatpush2.msra.mxu0 %v1678
  %1750 = vmatprep.subr.mxu0 0.0
  %1751 = vmatpush2.msra.mxu0 %v1677
  %1752 = vmatprep.subr.mxu0 0.0
  %1753 = vmatpush2.msra.mxu0 %v1676
  %1754 = vmatprep.subr.mxu0 0.0
  %1755 = vmatpush2.msra.mxu0 %v1675
  %1756 = vmatprep.subr.mxu0 0.0
  %1757 = vmatpush2.msra.mxu0 %v1674
  %1758 = vmatprep.subr.mxu0 0.0
  %1759 = vmatpush2.msra.mxu0 %v1673
  %1760 = vmatprep.subr.mxu0 0.0
  %1761 = vmatpush2.msra.mxu0 %v1672
  %1762 = vmatprep.subr.mxu0 0.0
  %1763 = vmatpush2.msra.mxu0 %v1671
  %1764 = vmatprep.subr.mxu0 0.0
  %1765 = vmatpush2.msra.mxu0 %v1670
  %1766 = vmatprep.mubr.f32.mxu0 %v1616
  %1767 = vmatmul.mubr.f32.gmra.mxu0 %v1613
  %v1768 = vpop.f32.mrf.mxu0
  %v1769 = vadd.f32 0.0, %v1768
  %v1770 = vpop.f32.mrf.mxu0
  %1771 = vmatprep.mubr.f32.mxu0 %v1623
  %1772 = vmatmul.mubr.f32.gmra.mxu0 %v1621
  %v1773 = vpop.f32.mrf.mxu0
  %v1774 = vadd.f32 0.0, %v1773
  %v1775 = vpop.f32.mrf.mxu0
  %1776 = vmatprep.mubr.f32.mxu0 %v1631
  %1777 = vmatmul.mubr.f32.gmra.mxu0 %v1628
  %v1778 = vpop.f32.mrf.mxu0
  %v1779 = vadd.f32 0.0, %v1778
  %v1780 = vpop.f32.mrf.mxu0
  %1781 = vmatprep.mubr.f32.mxu0 %v1638
  %1782 = vmatmul.mubr.f32.gmra.mxu0 %v1636
  %v1783 = vpop.f32.mrf.mxu0
  %v1784 = vadd.f32 0.0, %v1783
  %v1785 = vpop.f32.mrf.mxu0
  %1786 = vdwg.mxu0
  %1787 = vmatprep.subr.mxu0 0.0
  %1788 = vmatpush1.msra.mxu0 %v1701
  %1789 = vmatprep.subr.mxu0 0.0
  %1790 = vmatpush1.msra.mxu0 %v1700
  %1791 = vmatprep.subr.mxu0 0.0
  %1792 = vmatpush1.msra.mxu0 %v1699
  %1793 = vmatprep.subr.mxu0 0.0
  %1794 = vmatpush1.msra.mxu0 %v1698
  %1795 = vmatprep.subr.mxu0 0.0
  %1796 = vmatpush1.msra.mxu0 %v1697
  %1797 = vmatprep.subr.mxu0 0.0
  %1798 = vmatpush1.msra.mxu0 %v1696
  %1799 = vmatprep.subr.mxu0 0.0
  %1800 = vmatpush1.msra.mxu0 %v1695
  %1801 = vmatprep.subr.mxu0 0.0
  %1802 = vmatpush1.msra.mxu0 %v1694
  %1803 = vmatprep.subr.mxu0 0.0
  %1804 = vmatpush1.msra.mxu0 %v1693
  %1805 = vmatprep.subr.mxu0 0.0
  %1806 = vmatpush1.msra.mxu0 %v1692
  %1807 = vmatprep.subr.mxu0 0.0
  %1808 = vmatpush1.msra.mxu0 %v1691
  %1809 = vmatprep.subr.mxu0 0.0
  %1810 = vmatpush1.msra.mxu0 %v1690
  %1811 = vmatprep.subr.mxu0 0.0
  %1812 = vmatpush1.msra.mxu0 %v1689
  %1813 = vmatprep.subr.mxu0 0.0
  %1814 = vmatpush1.msra.mxu0 %v1688
  %1815 = vmatprep.subr.mxu0 0.0
  %1816 = vmatpush1.msra.mxu0 %v1687
  %1817 = vmatprep.subr.mxu0 0.0
  %1818 = vmatpush1.msra.mxu0 %v1686
  %1819 = vmatprep.subr.mxu0 0.0
  %1820 = vmatpush2.msra.mxu0 0.0
  %1821 = vmatprep.subr.mxu0 0.0
  %1822 = vmatpush2.msra.mxu0 0.0
  %1823 = vmatprep.subr.mxu0 0.0
  %1824 = vmatpush2.msra.mxu0 0.0
  %1825 = vmatprep.subr.mxu0 0.0
  %1826 = vmatpush2.msra.mxu0 0.0
  %1827 = vmatprep.subr.mxu0 0.0
  %1828 = vmatpush2.msra.mxu0 0.0
  %1829 = vmatprep.subr.mxu0 0.0
  %1830 = vmatpush2.msra.mxu0 0.0
  %1831 = vmatprep.subr.mxu0 0.0
  %1832 = vmatpush2.msra.mxu0 0.0
  %1833 = vmatprep.subr.mxu0 0.0
  %1834 = vmatpush2.msra.mxu0 0.0
  %1835 = vmatprep.subr.mxu0 0.0
  %1836 = vmatpush2.msra.mxu0 0.0
  %1837 = vmatprep.subr.mxu0 0.0
  %1838 = vmatpush2.msra.mxu0 0.0
  %1839 = vmatprep.subr.mxu0 0.0
  %1840 = vmatpush2.msra.mxu0 0.0
  %1841 = vmatprep.subr.mxu0 0.0
  %1842 = vmatpush2.msra.mxu0 0.0
  %1843 = vmatprep.subr.mxu0 0.0
  %1844 = vmatpush2.msra.mxu0 0.0
  %1845 = vmatprep.subr.mxu0 0.0
  %1846 = vmatpush2.msra.mxu0 0.0
  %1847 = vmatprep.subr.mxu0 0.0
  %1848 = vmatpush2.msra.mxu0 0.0
  %1849 = vmatprep.subr.mxu0 0.0
  %1850 = vmatpush2.msra.mxu0 0.0
  %1851 = vmatprep.mubr.f32.mxu0 0.0
  %1852 = vmatmul.mubr.f32.gmra.mxu0 %v1619
  %v1853 = vpop.f32.mrf.mxu0
  %v1854 = vadd.f32 %v1769, %v1853
  %v1855 = vpop.f32.mrf.mxu0
  %1856 = vmatprep.mubr.f32.mxu0 0.0
  %1857 = vmatmul.mubr.f32.gmra.mxu0 %v1625
  %v1858 = vpop.f32.mrf.mxu0
  %v1859 = vadd.f32 %v1774, %v1858
  %v1860 = vpop.f32.mrf.mxu0
  %1861 = vmatprep.mubr.f32.mxu0 0.0
  %1862 = vmatmul.mubr.f32.gmra.mxu0 %v1634
  %v1863 = vpop.f32.mrf.mxu0
  %v1864 = vadd.f32 %v1779, %v1863
  %v1865 = vpop.f32.mrf.mxu0
  %1866 = vmatprep.mubr.f32.mxu0 0.0
  %1867 = vmatmul.mubr.f32.gmra.mxu0 %v1640
  %v1868 = vpop.f32.mrf.mxu0
  %v1869 = vadd.f32 %v1784, %v1868
  %v1870 = vpop.f32.mrf.mxu0
  %1871 = vdwg.mxu0
  %1872 = vmatprep.subr.mxu0 0.0
  %1873 = vmatpush1.msra.mxu0 %v1566
  %1874 = vmatprep.subr.mxu0 0.0
  %1875 = vmatpush1.msra.mxu0 %v1565
  %1876 = vmatprep.subr.mxu0 0.0
  %1877 = vmatpush1.msra.mxu0 %v1564
  %1878 = vmatprep.subr.mxu0 0.0
  %1879 = vmatpush1.msra.mxu0 %v1563
  %1880 = vmatprep.subr.mxu0 0.0
  %1881 = vmatpush1.msra.mxu0 %v1562
  %1882 = vmatprep.subr.mxu0 0.0
  %1883 = vmatpush1.msra.mxu0 %v1561
  %1884 = vmatprep.subr.mxu0 0.0
  %1885 = vmatpush1.msra.mxu0 %v1560
  %1886 = vmatprep.subr.mxu0 0.0
  %1887 = vmatpush1.msra.mxu0 %v1559
  %1888 = vmatprep.subr.mxu0 0.0
  %1889 = vmatpush1.msra.mxu0 %v1558
  %1890 = vmatprep.subr.mxu0 0.0
  %1891 = vmatpush1.msra.mxu0 %v1557
  %1892 = vmatprep.subr.mxu0 0.0
  %1893 = vmatpush1.msra.mxu0 %v1556
  %1894 = vmatprep.subr.mxu0 0.0
  %1895 = vmatpush1.msra.mxu0 %v1555
  %1896 = vmatprep.subr.mxu0 0.0
  %1897 = vmatpush1.msra.mxu0 %v1554
  %1898 = vmatprep.subr.mxu0 0.0
  %1899 = vmatpush1.msra.mxu0 %v1553
  %1900 = vmatprep.subr.mxu0 0.0
  %1901 = vmatpush1.msra.mxu0 %v1552
  %1902 = vmatprep.subr.mxu0 0.0
  %1903 = vmatpush1.msra.mxu0 %v1551
  %1904 = vmatprep.subr.mxu0 0.0
  %1905 = vmatpush2.msra.mxu0 %v1582
  %1906 = vmatprep.subr.mxu0 0.0
  %1907 = vmatpush2.msra.mxu0 %v1581
  %1908 = vmatprep.subr.mxu0 0.0
  %1909 = vmatpush2.msra.mxu0 %v1580
  %1910 = vmatprep.subr.mxu0 0.0
  %1911 = vmatpush2.msra.mxu0 %v1579
  %1912 = vmatprep.subr.mxu0 0.0
  %1913 = vmatpush2.msra.mxu0 %v1578
  %1914 = vmatprep.subr.mxu0 0.0
  %1915 = vmatpush2.msra.mxu0 %v1577
  %1916 = vmatprep.subr.mxu0 0.0
  %1917 = vmatpush2.msra.mxu0 %v1576
  %1918 = vmatprep.subr.mxu0 0.0
  %1919 = vmatpush2.msra.mxu0 %v1575
  %1920 = vmatprep.subr.mxu0 0.0
  %1921 = vmatpush2.msra.mxu0 %v1574
  %1922 = vmatprep.subr.mxu0 0.0
  %1923 = vmatpush2.msra.mxu0 %v1573
  %1924 = vmatprep.subr.mxu0 0.0
  %1925 = vmatpush2.msra.mxu0 %v1572
  %1926 = vmatprep.subr.mxu0 0.0
  %1927 = vmatpush2.msra.mxu0 %v1571
  %1928 = vmatprep.subr.mxu0 0.0
  %1929 = vmatpush2.msra.mxu0 %v1570
  %1930 = vmatprep.subr.mxu0 0.0
  %1931 = vmatpush2.msra.mxu0 %v1569
  %1932 = vmatprep.subr.mxu0 0.0
  %1933 = vmatpush2.msra.mxu0 %v1568
  %1934 = vmatprep.subr.mxu0 0.0
  %1935 = vmatpush2.msra.mxu0 %v1567
  %1936 = vmatprep.mubr.f32.mxu0 %v1540
  %1937 = vmatmul.mubr.f32.gmra.mxu0 %v1539
  %v1938 = vpop.f32.mrf.mxu0
  %v1939 = vadd.f32 %v1854, %v1938
  %v1940 = vpop.f32.mrf.mxu0
  %1941 = vmatprep.mubr.f32.mxu0 %v1509
  %1942 = vmatmul.mubr.f32.gmra.mxu0 %v1507
  %v1943 = vpop.f32.mrf.mxu0
  %v1944 = vadd.f32 %v1859, %v1943
  %v1945 = vpop.f32.mrf.mxu0
  %1946 = vmatprep.mubr.f32.mxu0 %v1543
  %1947 = vmatmul.mubr.f32.gmra.mxu0 %v1542
  %v1948 = vpop.f32.mrf.mxu0
  %v1949 = vadd.f32 %v1864, %v1948
  %v1950 = vpop.f32.mrf.mxu0
  %1951 = vmatprep.mubr.f32.mxu0 %v1518
  %1952 = vmatmul.mubr.f32.gmra.mxu0 %v1516
  %v1953 = vpop.f32.mrf.mxu0
  %v1954 = vadd.f32 %v1869, %v1953
  %v1955 = vpop.f32.mrf.mxu0
  %1956 = vdwg.mxu0
  %1957 = vmatprep.subr.mxu0 0.0
  %1958 = vmatpush1.msra.mxu0 %v1598
  %1959 = vmatprep.subr.mxu0 0.0
  %1960 = vmatpush1.msra.mxu0 %v1597
  %1961 = vmatprep.subr.mxu0 0.0
  %1962 = vmatpush1.msra.mxu0 %v1596
  %1963 = vmatprep.subr.mxu0 0.0
  %1964 = vmatpush1.msra.mxu0 %v1595
  %1965 = vmatprep.subr.mxu0 0.0
  %1966 = vmatpush1.msra.mxu0 %v1594
  %1967 = vmatprep.subr.mxu0 0.0
  %1968 = vmatpush1.msra.mxu0 %v1593
  %1969 = vmatprep.subr.mxu0 0.0
  %1970 = vmatpush1.msra.mxu0 %v1592
  %1971 = vmatprep.subr.mxu0 0.0
  %1972 = vmatpush1.msra.mxu0 %v1591
  %1973 = vmatprep.subr.mxu0 0.0
  %1974 = vmatpush1.msra.mxu0 %v1590
  %1975 = vmatprep.subr.mxu0 0.0
  %1976 = vmatpush1.msra.mxu0 %v1589
  %1977 = vmatprep.subr.mxu0 0.0
  %1978 = vmatpush1.msra.mxu0 %v1588
  %1979 = vmatprep.subr.mxu0 0.0
  %1980 = vmatpush1.msra.mxu0 %v1587
  %1981 = vmatprep.subr.mxu0 0.0
  %1982 = vmatpush1.msra.mxu0 %v1586
  %1983 = vmatprep.subr.mxu0 0.0
  %1984 = vmatpush1.msra.mxu0 %v1585
  %1985 = vmatprep.subr.mxu0 0.0
  %1986 = vmatpush1.msra.mxu0 %v1584
  %1987 = vmatprep.subr.mxu0 0.0
  %1988 = vmatpush1.msra.mxu0 %v1583
  %1989 = vmatprep.subr.mxu0 0.0
  %1990 = vmatpush2.msra.mxu0 0.0
  %1991 = vmatprep.subr.mxu0 0.0
  %1992 = vmatpush2.msra.mxu0 0.0
  %1993 = vmatprep.subr.mxu0 0.0
  %1994 = vmatpush2.msra.mxu0 0.0
  %1995 = vmatprep.subr.mxu0 0.0
  %1996 = vmatpush2.msra.mxu0 0.0
  %1997 = vmatprep.subr.mxu0 0.0
  %1998 = vmatpush2.msra.mxu0 0.0
  %1999 = vmatprep.subr.mxu0 0.0
  %2000 = vmatpush2.msra.mxu0 0.0
  %2001 = vmatprep.subr.mxu0 0.0
  %2002 = vmatpush2.msra.mxu0 0.0
  %2003 = vmatprep.subr.mxu0 0.0
  %2004 = vmatpush2.msra.mxu0 0.0
  %2005 = vmatprep.subr.mxu0 0.0
  %2006 = vmatpush2.msra.mxu0 0.0
  %2007 = vmatprep.subr.mxu0 0.0
  %2008 = vmatpush2.msra.mxu0 0.0
  %2009 = vmatprep.subr.mxu0 0.0
  %2010 = vmatpush2.msra.mxu0 0.0
  %2011 = vmatprep.subr.mxu0 0.0
  %2012 = vmatpush2.msra.mxu0 0.0
  %2013 = vmatprep.subr.mxu0 0.0
  %2014 = vmatpush2.msra.mxu0 0.0
  %2015 = vmatprep.subr.mxu0 0.0
  %2016 = vmatpush2.msra.mxu0 0.0
  %2017 = vmatprep.subr.mxu0 0.0
  %2018 = vmatpush2.msra.mxu0 0.0
  %2019 = vmatprep.subr.mxu0 0.0
  %2020 = vmatpush2.msra.mxu0 0.0
  %2021 = vmatprep.mubr.f32.mxu0 0.0
  %2022 = vmatmul.mubr.f32.gmra.mxu0 %v1541
  %v2023 = vpop.f32.mrf.mxu0
  %v2024 = vadd.f32 %v1939, %v2023
  %v2025 = vpop.f32.mrf.mxu0
  %2026 = vmatprep.mubr.f32.mxu0 0.0
  %2027 = vmatmul.mubr.f32.gmra.mxu0 %v1511
  %v2028 = vpop.f32.mrf.mxu0
  %v2029 = vadd.f32 %v1944, %v2028
  %v2030 = vpop.f32.mrf.mxu0
  %2031 = vmatprep.mubr.f32.mxu0 0.0
  %2032 = vmatmul.mubr.f32.gmra.mxu0 %v1544
  %v2033 = vpop.f32.mrf.mxu0
  %v2034 = vadd.f32 %v1949, %v2033
  %v2035 = vpop.f32.mrf.mxu0
  %2036 = vmatprep.mubr.f32.mxu0 0.0
  %2037 = vmatmul.mubr.f32.gmra.mxu0 %v1520
  %v2038 = vpop.f32.mrf.mxu0
  %v2039 = vadd.f32 %v1954, %v2038
  %v2040 = vpop.f32.mrf.mxu0
  %2041 = vdwg.mxu0
  %v2042 = vrot.slane %v1539, 2
  %v2043 = vrot.slane %v1507, 2
  %v2044 = vsel %vm577, %v2042, %v2043
  %v2045 = vrot.slane %v1540, 2
  %v2046 = vrot.slane %v1509, 2
  %v2047 = vsel %vm577, %v2045, %v2046
  %v2048 = vrot.slane %v1541, 2
  %v2049 = vrot.slane %v1511, 2
  %v2050 = vsel %vm577, %v2048, %v2049
  %v2051 = vrot.slane %v1545, 2
  %v2052 = vsel %vm577, %v2043, %v2051
  %v2053 = vrot.slane %v1546, 2
  %v2054 = vsel %vm577, %v2046, %v2053
  %v2055 = vrot.slane %v1547, 2
  %v2056 = vsel %vm577, %v2049, %v2055
  %v2057 = vrot.slane %v1542, 2
  %v2058 = vrot.slane %v1516, 2
  %v2059 = vsel %vm577, %v2057, %v2058
  %v2060 = vrot.slane %v1543, 2
  %v2061 = vrot.slane %v1518, 2
  %v2062 = vsel %vm577, %v2060, %v2061
  %v2063 = vrot.slane %v1544, 2
  %v2064 = vrot.slane %v1520, 2
  %v2065 = vsel %vm577, %v2063, %v2064
  %v2066 = vrot.slane %v1548, 2
  %v2067 = vsel %vm577, %v2058, %v2066
  %v2068 = vrot.slane %v1549, 2
  %v2069 = vsel %vm577, %v2061, %v2068
  %v2070 = vrot.slane %v1550, 2
  %v2071 = vsel %vm577, %v2064, %v2070
  %s2084 = scalar_lea.vmem %s3, 768
  %v2085 = vld [vmem:[%s2084] sm:$0xff]
  %v2086 = vld [vmem:[%s2084 + $0x8] sm:$0xff]
  %v2087 = vld [vmem:[%s2084 + $0x10] sm:$0xff]
  %v2088 = vld [vmem:[%s2084 + $0x18] sm:$0xff]
  %v2089 = vld [vmem:[%s2084 + $0x20] sm:$0xff]
  %v2090 = vld [vmem:[%s2084 + $0x28] sm:$0xff]
  %v2091 = vld [vmem:[%s2084 + $0x30] sm:$0xff]
  %v2092 = vld [vmem:[%s2084 + $0x38] sm:$0xff]
  %v2093 = vld [vmem:[%s2084 + $0x40] sm:$0xff]
  %v2094 = vld [vmem:[%s2084 + $0x48] sm:$0xff]
  %v2095 = vld [vmem:[%s2084 + $0x50] sm:$0xff]
  %v2096 = vld [vmem:[%s2084 + $0x58] sm:$0xff]
  %v2097 = vld [vmem:[%s2084 + $0x60] sm:$0xff]
  %v2098 = vld [vmem:[%s2084 + $0x68] sm:$0xff]
  %v2099 = vld [vmem:[%s2084 + $0x70] sm:$0xff]
  %v2100 = vld [vmem:[%s2084 + $0x78] sm:$0xff]
  %v2101 = vld [vmem:[%s2084 + $0x80] sm:$0xff]
  %v2102 = vld [vmem:[%s2084 + $0x88] sm:$0xff]
  %v2103 = vld [vmem:[%s2084 + $0x90] sm:$0xff]
  %v2104 = vld [vmem:[%s2084 + $0x98] sm:$0xff]
  %v2105 = vld [vmem:[%s2084 + $0xa0] sm:$0xff]
  %v2106 = vld [vmem:[%s2084 + $0xa8] sm:$0xff]
  %v2107 = vld [vmem:[%s2084 + $0xb0] sm:$0xff]
  %v2108 = vld [vmem:[%s2084 + $0xb8] sm:$0xff]
  %v2109 = vld [vmem:[%s2084 + $0xc0] sm:$0xff]
  %v2110 = vld [vmem:[%s2084 + $0xc8] sm:$0xff]
  %v2111 = vld [vmem:[%s2084 + $0xd0] sm:$0xff]
  %v2112 = vld [vmem:[%s2084 + $0xd8] sm:$0xff]
  %v2113 = vld [vmem:[%s2084 + $0xe0] sm:$0xff]
  %v2114 = vld [vmem:[%s2084 + $0xe8] sm:$0xff]
  %v2115 = vld [vmem:[%s2084 + $0xf0] sm:$0xff]
  %v2116 = vld [vmem:[%s2084 + $0xf8] sm:$0xff]
  %v2117 = vld [vmem:[%s2084 + $0x100] sm:$0xff]
  %v2118 = vld [vmem:[%s2084 + $0x108] sm:$0xff]
  %v2119 = vld [vmem:[%s2084 + $0x110] sm:$0xff]
  %v2120 = vld [vmem:[%s2084 + $0x118] sm:$0xff]
  %v2121 = vld [vmem:[%s2084 + $0x120] sm:$0xff]
  %v2122 = vld [vmem:[%s2084 + $0x128] sm:$0xff]
  %v2123 = vld [vmem:[%s2084 + $0x130] sm:$0xff]
  %v2124 = vld [vmem:[%s2084 + $0x138] sm:$0xff]
  %v2125 = vld [vmem:[%s2084 + $0x140] sm:$0xff]
  %v2126 = vld [vmem:[%s2084 + $0x148] sm:$0xff]
  %v2127 = vld [vmem:[%s2084 + $0x150] sm:$0xff]
  %v2128 = vld [vmem:[%s2084 + $0x158] sm:$0xff]
  %v2129 = vld [vmem:[%s2084 + $0x160] sm:$0xff]
  %v2130 = vld [vmem:[%s2084 + $0x168] sm:$0xff]
  %v2131 = vld [vmem:[%s2084 + $0x170] sm:$0xff]
  %v2132 = vld [vmem:[%s2084 + $0x178] sm:$0xff]
  %2133 = vmatprep.subr.mxu0 0.0
  %2134 = vmatpush1.msra.mxu0 %v2100
  %2135 = vmatprep.subr.mxu0 0.0
  %2136 = vmatpush1.msra.mxu0 %v2099
  %2137 = vmatprep.subr.mxu0 0.0
  %2138 = vmatpush1.msra.mxu0 %v2098
  %2139 = vmatprep.subr.mxu0 0.0
  %2140 = vmatpush1.msra.mxu0 %v2097
  %2141 = vmatprep.subr.mxu0 0.0
  %2142 = vmatpush1.msra.mxu0 %v2096
  %2143 = vmatprep.subr.mxu0 0.0
  %2144 = vmatpush1.msra.mxu0 %v2095
  %2145 = vmatprep.subr.mxu0 0.0
  %2146 = vmatpush1.msra.mxu0 %v2094
  %2147 = vmatprep.subr.mxu0 0.0
  %2148 = vmatpush1.msra.mxu0 %v2093
  %2149 = vmatprep.subr.mxu0 0.0
  %2150 = vmatpush1.msra.mxu0 %v2092
  %2151 = vmatprep.subr.mxu0 0.0
  %2152 = vmatpush1.msra.mxu0 %v2091
  %2153 = vmatprep.subr.mxu0 0.0
  %2154 = vmatpush1.msra.mxu0 %v2090
  %2155 = vmatprep.subr.mxu0 0.0
  %2156 = vmatpush1.msra.mxu0 %v2089
  %2157 = vmatprep.subr.mxu0 0.0
  %2158 = vmatpush1.msra.mxu0 %v2088
  %2159 = vmatprep.subr.mxu0 0.0
  %2160 = vmatpush1.msra.mxu0 %v2087
  %2161 = vmatprep.subr.mxu0 0.0
  %2162 = vmatpush1.msra.mxu0 %v2086
  %2163 = vmatprep.subr.mxu0 0.0
  %2164 = vmatpush1.msra.mxu0 %v2085
  %2165 = vmatprep.subr.mxu0 0.0
  %2166 = vmatpush2.msra.mxu0 %v2116
  %2167 = vmatprep.subr.mxu0 0.0
  %2168 = vmatpush2.msra.mxu0 %v2115
  %2169 = vmatprep.subr.mxu0 0.0
  %2170 = vmatpush2.msra.mxu0 %v2114
  %2171 = vmatprep.subr.mxu0 0.0
  %2172 = vmatpush2.msra.mxu0 %v2113
  %2173 = vmatprep.subr.mxu0 0.0
  %2174 = vmatpush2.msra.mxu0 %v2112
  %2175 = vmatprep.subr.mxu0 0.0
  %2176 = vmatpush2.msra.mxu0 %v2111
  %2177 = vmatprep.subr.mxu0 0.0
  %2178 = vmatpush2.msra.mxu0 %v2110
  %2179 = vmatprep.subr.mxu0 0.0
  %2180 = vmatpush2.msra.mxu0 %v2109
  %2181 = vmatprep.subr.mxu0 0.0
  %2182 = vmatpush2.msra.mxu0 %v2108
  %2183 = vmatprep.subr.mxu0 0.0
  %2184 = vmatpush2.msra.mxu0 %v2107
  %2185 = vmatprep.subr.mxu0 0.0
  %2186 = vmatpush2.msra.mxu0 %v2106
  %2187 = vmatprep.subr.mxu0 0.0
  %2188 = vmatpush2.msra.mxu0 %v2105
  %2189 = vmatprep.subr.mxu0 0.0
  %2190 = vmatpush2.msra.mxu0 %v2104
  %2191 = vmatprep.subr.mxu0 0.0
  %2192 = vmatpush2.msra.mxu0 %v2103
  %2193 = vmatprep.subr.mxu0 0.0
  %2194 = vmatpush2.msra.mxu0 %v2102
  %2195 = vmatprep.subr.mxu0 0.0
  %2196 = vmatpush2.msra.mxu0 %v2101
  %2197 = vmatprep.mubr.f32.mxu0 %v2047
  %2198 = vmatmul.mubr.f32.gmra.mxu0 %v2044
  %v2199 = vpop.f32.mrf.mxu0
  %v2200 = vadd.f32 0.0, %v2199
  %v2201 = vpop.f32.mrf.mxu0
  %2202 = vmatprep.mubr.f32.mxu0 %v2054
  %2203 = vmatmul.mubr.f32.gmra.mxu0 %v2052
  %v2204 = vpop.f32.mrf.mxu0
  %v2205 = vadd.f32 0.0, %v2204
  %v2206 = vpop.f32.mrf.mxu0
  %2207 = vmatprep.mubr.f32.mxu0 %v2062
  %2208 = vmatmul.mubr.f32.gmra.mxu0 %v2059
  %v2209 = vpop.f32.mrf.mxu0
  %v2210 = vadd.f32 0.0, %v2209
  %v2211 = vpop.f32.mrf.mxu0
  %2212 = vmatprep.mubr.f32.mxu0 %v2069
  %2213 = vmatmul.mubr.f32.gmra.mxu0 %v2067
  %v2214 = vpop.f32.mrf.mxu0
  %v2215 = vadd.f32 0.0, %v2214
  %v2216 = vpop.f32.mrf.mxu0
  %2217 = vdwg.mxu0
  %2218 = vmatprep.subr.mxu0 0.0
  %2219 = vmatpush1.msra.mxu0 %v2132
  %2220 = vmatprep.subr.mxu0 0.0
  %2221 = vmatpush1.msra.mxu0 %v2131
  %2222 = vmatprep.subr.mxu0 0.0
  %2223 = vmatpush1.msra.mxu0 %v2130
  %2224 = vmatprep.subr.mxu0 0.0
  %2225 = vmatpush1.msra.mxu0 %v2129
  %2226 = vmatprep.subr.mxu0 0.0
  %2227 = vmatpush1.msra.mxu0 %v2128
  %2228 = vmatprep.subr.mxu0 0.0
  %2229 = vmatpush1.msra.mxu0 %v2127
  %2230 = vmatprep.subr.mxu0 0.0
  %2231 = vmatpush1.msra.mxu0 %v2126
  %2232 = vmatprep.subr.mxu0 0.0
  %2233 = vmatpush1.msra.mxu0 %v2125
  %2234 = vmatprep.subr.mxu0 0.0
  %2235 = vmatpush1.msra.mxu0 %v2124
  %2236 = vmatprep.subr.mxu0 0.0
  %2237 = vmatpush1.msra.mxu0 %v2123
  %2238 = vmatprep.subr.mxu0 0.0
  %2239 = vmatpush1.msra.mxu0 %v2122
  %2240 = vmatprep.subr.mxu0 0.0
  %2241 = vmatpush1.msra.mxu0 %v2121
  %2242 = vmatprep.subr.mxu0 0.0
  %2243 = vmatpush1.msra.mxu0 %v2120
  %2244 = vmatprep.subr.mxu0 0.0
  %2245 = vmatpush1.msra.mxu0 %v2119
  %2246 = vmatprep.subr.mxu0 0.0
  %2247 = vmatpush1.msra.mxu0 %v2118
  %2248 = vmatprep.subr.mxu0 0.0
  %2249 = vmatpush1.msra.mxu0 %v2117
  %2250 = vmatprep.subr.mxu0 0.0
  %2251 = vmatpush2.msra.mxu0 0.0
  %2252 = vmatprep.subr.mxu0 0.0
  %2253 = vmatpush2.msra.mxu0 0.0
  %2254 = vmatprep.subr.mxu0 0.0
  %2255 = vmatpush2.msra.mxu0 0.0
  %2256 = vmatprep.subr.mxu0 0.0
  %2257 = vmatpush2.msra.mxu0 0.0
  %2258 = vmatprep.subr.mxu0 0.0
  %2259 = vmatpush2.msra.mxu0 0.0
  %2260 = vmatprep.subr.mxu0 0.0
  %2261 = vmatpush2.msra.mxu0 0.0
  %2262 = vmatprep.subr.mxu0 0.0
  %2263 = vmatpush2.msra.mxu0 0.0
  %2264 = vmatprep.subr.mxu0 0.0
  %2265 = vmatpush2.msra.mxu0 0.0
  %2266 = vmatprep.subr.mxu0 0.0
  %2267 = vmatpush2.msra.mxu0 0.0
  %2268 = vmatprep.subr.mxu0 0.0
  %2269 = vmatpush2.msra.mxu0 0.0
  %2270 = vmatprep.subr.mxu0 0.0
  %2271 = vmatpush2.msra.mxu0 0.0
  %2272 = vmatprep.subr.mxu0 0.0
  %2273 = vmatpush2.msra.mxu0 0.0
  %2274 = vmatprep.subr.mxu0 0.0
  %2275 = vmatpush2.msra.mxu0 0.0
  %2276 = vmatprep.subr.mxu0 0.0
  %2277 = vmatpush2.msra.mxu0 0.0
  %2278 = vmatprep.subr.mxu0 0.0
  %2279 = vmatpush2.msra.mxu0 0.0
  %2280 = vmatprep.subr.mxu0 0.0
  %2281 = vmatpush2.msra.mxu0 0.0
  %2282 = vmatprep.mubr.f32.mxu0 0.0
  %2283 = vmatmul.mubr.f32.gmra.mxu0 %v2050
  %v2284 = vpop.f32.mrf.mxu0
  %v2285 = vadd.f32 %v2200, %v2284
  %v2286 = vpop.f32.mrf.mxu0
  %2287 = vmatprep.mubr.f32.mxu0 0.0
  %2288 = vmatmul.mubr.f32.gmra.mxu0 %v2056
  %v2289 = vpop.f32.mrf.mxu0
  %v2290 = vadd.f32 %v2205, %v2289
  %v2291 = vpop.f32.mrf.mxu0
  %2292 = vmatprep.mubr.f32.mxu0 0.0
  %2293 = vmatmul.mubr.f32.gmra.mxu0 %v2065
  %v2294 = vpop.f32.mrf.mxu0
  %v2295 = vadd.f32 %v2210, %v2294
  %v2296 = vpop.f32.mrf.mxu0
  %2297 = vmatprep.mubr.f32.mxu0 0.0
  %2298 = vmatmul.mubr.f32.gmra.mxu0 %v2071
  %v2299 = vpop.f32.mrf.mxu0
  %v2300 = vadd.f32 %v2215, %v2299
  %v2301 = vpop.f32.mrf.mxu0
  %2302 = vdwg.mxu0
  %v2303 = vadd.f32 %v2024, %v2285
  %v2304 = vadd.f32 %v2029, %v2290
  %v2305 = vadd.f32 %v2034, %v2295
  %v2306 = vadd.f32 %v2039, %v2300
  %v2307 = vld [vmem:[%s4] sm:$0x1]
  %v2309 = vlaneseq
  %v2310 = vshrl.u32 %v2309, 7
  %v2311 = vsub.s32 0, %v2310
  %v2312 = vrot.slane %v2307, %v2311
  %v2314 = vadd.f32 %v2303, %v2312
  %v2315 = vadd.f32 %v2304, %v2312
  %v2316 = vadd.f32 %v2305, %v2312
  %v2317 = vadd.f32 %v2306, %v2312
  %v2318 = vmax.f32 %v2314, 0.0
  %v2319 = vmax.f32 %v2315, 0.0
  %v2320 = vmax.f32 %v2316, 0.0
  %v2321 = vmax.f32 %v2317, 0.0
  %2322 = vst [vmem:[%s5] sm:$0xff] %v2318
  %2323 = vst [vmem:[%s5 + $0x8] sm:$0xff] %v2319
  %2324 = vst [vmem:[%s5 + $0x10] sm:$0xff] %v2320
  %2325 = vst [vmem:[%s5 + $0x18] sm:$0xff] %v2321
  // Predicated region
  $region22: #{multi_scale_cnn.1} parent=0 // pred_check
    _
  $region23: #{multi_scale_cnn.1} parent=0 // pred_check_branch
    %2327 = sbr.rel (0) target = $region25
  $region24: #{multi_scale_cnn.1} parent=0 // pred_region
    _
  $region25: #{multi_scale_cnn.1} parent=0 // pred_fallthru
    _
  // Predicated region
  $region26: #{multi_scale_cnn.1} parent=0 // pred_check
    _
  $region27: #{multi_scale_cnn.1} parent=0 // pred_check_branch
    %2329 = sbr.rel (0) target = $region29
  $region28: #{multi_scale_cnn.1} parent=0 // pred_region
    _
  $region29: #{multi_scale_cnn.1} parent=0 // pred_fallthru
    _

</llo_original>
